<compile_context>
chip_gen: v5e
topology: v5e:2x2
jax: 0.10.0
libtpu: 0.0.40
codegen_flags: <defaults>
</compile_context>

<pallas_src>
import jax
import jax.numpy as jnp
from jax.experimental import pallas as pl
from jax.experimental.pallas import tpu as pltpu


def _nonlocal_kernel(x_ref, m_ref, r_ref, wvT_ref, bv_ref, gamma_ref, o_ref):
    b_blk = x_ref.shape[0]
    gamma = gamma_ref[0]
    m_bf = m_ref[...]        # (C, C) bf16   fused Wq^T . Wk
    wvT_bf = wvT_ref[...]    # (C, C) bf16   Wv^T
    r_row = r_ref[...]       # (1, C) f32    Wk^T . bq  (j-dependent bias term)
    bv_row = bv_ref[...]     # (1, C) f32

    def body(b, carry):
        x_cl = x_ref[b]                                   # (C, L) f32, lane-dense
        x_lc = x_cl.T                                     # (L, C) one small XLU transpose
        x_lc_bf = x_lc.astype(jnp.bfloat16)
        x_cl_bf = x_cl.astype(jnp.bfloat16)

        # energy[i,j] = x_i^T M x_j + r^T x_j   (row-constant terms dropped:
        # softmax-invariant).  Two NN MXU dots, f32 accumulation.
        t = jnp.dot(x_lc_bf, m_bf, preferred_element_type=jnp.float32) + r_row   # (L, C)
        energy = jnp.dot(t.astype(jnp.bfloat16), x_cl_bf,
                         preferred_element_type=jnp.float32)                     # (L, L)

        # Stable softmax with deferred normalization (f32 on VPU/EUP).
        mx = jnp.max(energy, axis=-1, keepdims=True)
        p = jnp.exp(energy - mx)                                                 # unnormalized
        s = jnp.sum(p, axis=-1, keepdims=True)                                   # (L, 1)

        # V in (L, C) orientation: v_lc[j, c] = (Wv x_j + bv)[c].
        v_lc = jnp.dot(x_lc_bf, wvT_bf, preferred_element_type=jnp.float32) + bv_row  # (L, C)

        # out_lc[i, c] = sum_j p[i, j] v_lc[j, c]   (NN matmul, K = L)
        out_lc = jnp.dot(p.astype(jnp.bfloat16), v_lc.astype(jnp.bfloat16),
                         preferred_element_type=jnp.float32)                     # (L, C)

        # Fold softmax normalization and gamma into one scale (EUP reciprocal),
        # one small (L,C)->(C,L) transpose, single lane-dense store + residual.
        scale = gamma * pl.reciprocal(s, approx=True)                            # (L, 1)
        o_ref[b] = (out_lc * scale).T + x_cl
        return carry

    jax.lax.fori_loop(0, b_blk, body, 0, unroll=True)


def _pick_batch_block(n, max_blk=4):
    """Largest divisor of n <= max_blk that still leaves >= 2 grid steps
    (so v7x's two TensorCores both get work); 1 for tiny n."""
    best = 1
    for d in range(1, min(max_blk, n) + 1):
        if n % d == 0 and (n // d >= 2 or n == 1):
            best = d
    return best


def non_local_block(x_nchw, wq, bq, wk, bk, wv, bv, gamma, *, b_blk=None):
    """x_nchw: (N, C, W, H); wq/wk: (C//8, C, 1, 1); wv: (C, C, 1, 1); gamma: (1,)."""
    N, C, W, H = x_nchw.shape
    Cq = wq.shape[0]
    L = W * H

    if b_blk is None:
        b_blk = _pick_batch_block(N)
    assert N % b_blk == 0, (N, b_blk)

    # NCHW -> (N, C, L) is a free reshape (same memory order).  f32 I/O keeps
    # the residual exact and avoids a wrapper-side conversion pass.
    x = x_nchw.reshape(N, C, L).astype(jnp.float32)

    # Tiny wrapper-side weight fusions (read once, VMEM-resident across grid).
    wq2 = wq.reshape(Cq, C).astype(jnp.float32)
    wk2 = wk.reshape(Cq, C).astype(jnp.float32)
    m_qk = (wq2.T @ wk2).astype(jnp.bfloat16)                            # (C, C)
    r_row = (wk2.T @ bq.reshape(Cq).astype(jnp.float32)).reshape(1, C)   # (1, C) f32
    wvT = wv.reshape(C, C).T.astype(jnp.bfloat16)                        # (C, C)
    bv_row = bv.reshape(1, C).astype(jnp.float32)
    gamma1 = gamma.reshape(1).astype(jnp.float32)

    out = pl.pallas_call(
        _nonlocal_kernel,
        out_shape=jax.ShapeDtypeStruct((N, C, L), jnp.float32),
        grid_spec=pltpu.PrefetchScalarGridSpec(
            num_scalar_prefetch=0,
            grid=(N // b_blk,),
            in_specs=[
                pl.BlockSpec((b_blk, C, L), lambda g: (g, 0, 0)),    # x slab
                pl.BlockSpec((C, C), lambda g: (0, 0)),              # M = Wq^T Wk
                pl.BlockSpec((1, C), lambda g: (0, 0)),              # r = Wk^T bq
                pl.BlockSpec((C, C), lambda g: (0, 0)),              # Wv^T
                pl.BlockSpec((1, C), lambda g: (0, 0)),              # bv
                pl.BlockSpec(memory_space=pltpu.MemorySpace.SMEM),   # gamma (scalar)
            ],
            out_specs=pl.BlockSpec((b_blk, C, L), lambda g: (g, 0, 0)),
        ),
        compiler_params=pltpu.CompilerParams(
            dimension_semantics=("parallel",)),    # v7x: split grid over both TCs
    )(x, m_qk, r_row, wvT, bv_row, gamma1)

    return out.reshape(N, C, W, H)


def _reference(x, wq, bq, wk, bk, wv, bv, gamma):
    """Pure-JAX f32 reference mirroring NonLocalBlock.forward."""
    N, C, W, H = x.shape
    L = W * H
    xf = x.reshape(N, C, L).astype(jnp.float32)

    def proj(w, b):
        return (jnp.einsum('oc,ncl->nol', w.reshape(w.shape[0], C).astype(jnp.float32), xf)
                + b.reshape(1, -1, 1).astype(jnp.float32))

    q = proj(wq, bq)                               # (N, Cq, L)
    k = proj(wk, bk)                               # (N, Cq, L)
    v = proj(wv, bv)                               # (N, C, L)
    energy = jnp.einsum('nci,ncj->nij', q, k)      # (N, L, L)
    attn = jax.nn.softmax(energy, axis=-1)
    out = jnp.einsum('ncj,nij->nci', v, attn)      # (N, C, L)
    out = out.reshape(N, C, W, H)
    return gamma.reshape(())[...] * out + x


if __name__ == "__main__":
    # in_dim must be divisible by 8 (query/key channels = in_dim // 8).
    N, C, W, H = 2, 32, 16, 16
    Cq = C // 8

    key = jax.random.PRNGKey(0)
    ks = jax.random.split(key, 7)
    x = jax.random.normal(ks[0], (N, C, W, H), dtype=jnp.float32)
    # Conv2d(k=1) weight layout: (out_channels, in_channels, 1, 1)
    wq = 0.1 * jax.random.normal(ks[1], (Cq, C, 1, 1), dtype=jnp.float32)
    wk = 0.1 * jax.random.normal(ks[2], (Cq, C, 1, 1), dtype=jnp.float32)
    wv = 0.1 * jax.random.normal(ks[3], (C, C, 1, 1), dtype=jnp.float32)
    bq = 0.1 * jax.random.normal(ks[4], (Cq,), dtype=jnp.float32)
    bk = 0.1 * jax.random.normal(ks[5], (Cq,), dtype=jnp.float32)
    bv = 0.1 * jax.random.normal(ks[6], (C,), dtype=jnp.float32)
    # gamma is nn.Parameter(torch.zeros(1)) at init; use a nonzero value so the
    # attention path is exercised numerically (semantics unchanged).
    gamma = jnp.array([0.7], dtype=jnp.float32)

    out = non_local_block(x, wq, bq, wk, bk, wv, bv, gamma)
    out = jax.block_until_ready(out)

    ref = _reference(x, wq, bq, wk, bk, wv, bv, gamma)
    assert out.shape == (N, C, W, H), out.shape
    # Tolerance relaxed vs the pure-f32 version: bf16 MXU operands + approx
    # reciprocal for the softmax denominator.
    assert jnp.allclose(out, ref, rtol=2e-2, atol=2e-2), \
        f"max abs err = {jnp.max(jnp.abs(out - ref))}"

    print("KERNEL_OK")
</pallas_src>

<mosaic_0001>
module attributes {stable_mosaic.version = 11 : i64} {
  func.func @_nonlocal_kernel(%arg0: i32, %arg1: memref<1x32x256xf32, #tpu.memory_space<vmem>>, %arg2: memref<32x32xbf16, #tpu.memory_space<vmem>>, %arg3: memref<1x32xf32, #tpu.memory_space<vmem>>, %arg4: memref<32x32xbf16, #tpu.memory_space<vmem>>, %arg5: memref<1x32xf32, #tpu.memory_space<vmem>>, %arg6: memref<1xf32, #tpu.memory_space<smem>>, %arg7: memref<1x32x256xf32, #tpu.memory_space<vmem>>) attributes {dimension_semantics = [#tpu.dimension_semantics<parallel>], iteration_bounds = array<i64: 2>, scalar_prefetch = 0 : i64, scratch_operands = 0 : i64, tpu.core_type = #tpu.core_type<tc>, window_params = [{transform_indices = @transform_0, window_bounds = array<i64: 1, 32, 256>}, {pipeline_mode = #tpu.pipeline_mode<synchronous>, transform_indices = @transform_1, window_bounds = array<i64: 32, 32>}, {pipeline_mode = #tpu.pipeline_mode<synchronous>, transform_indices = @transform_2, window_bounds = array<i64: 1, 32>}, {pipeline_mode = #tpu.pipeline_mode<synchronous>, transform_indices = @transform_3, window_bounds = array<i64: 32, 32>}, {pipeline_mode = #tpu.pipeline_mode<synchronous>, transform_indices = @transform_4, window_bounds = array<i64: 1, 32>}, {transform_indices = @transform_5, window_bounds = array<i64: 1>}, {transform_indices = @transform_6, window_bounds = array<i64: 1, 32, 256>}]} {
    %c0 = arith.constant 0 : index
    %0 = memref.load %arg6[%c0] : memref<1xf32, #tpu.memory_space<smem>>
    %c0_0 = arith.constant 0 : index
    %c0_1 = arith.constant 0 : index
    %1 = vector.load %arg2[%c0_0, %c0_1] : memref<32x32xbf16, #tpu.memory_space<vmem>>, vector<32x32xbf16>
    %c0_2 = arith.constant 0 : index
    %c0_3 = arith.constant 0 : index
    %2 = vector.load %arg4[%c0_2, %c0_3] : memref<32x32xbf16, #tpu.memory_space<vmem>>, vector<32x32xbf16>
    %c0_4 = arith.constant 0 : index
    %c0_5 = arith.constant 0 : index
    %3 = vector.load %arg3[%c0_4, %c0_5] : memref<1x32xf32, #tpu.memory_space<vmem>>, vector<1x32xf32>
    %c0_6 = arith.constant 0 : index
    %c0_7 = arith.constant 0 : index
    %4 = vector.load %arg5[%c0_6, %c0_7] : memref<1x32xf32, #tpu.memory_space<vmem>>, vector<1x32xf32>
    %c0_i32 = arith.constant 0 : i32
    %5 = arith.index_cast %c0_i32 : i32 to index
    %c0_8 = arith.constant 0 : index
    %c0_9 = arith.constant 0 : index
    %6 = vector.load %arg1[%5, %c0_8, %c0_9] : memref<1x32x256xf32, #tpu.memory_space<vmem>>, vector<1x32x256xf32>
    %7 = vector.shape_cast %6 : vector<1x32x256xf32> to vector<32x256xf32>
    %8 = tpu.transpose %7, [1, 0] : vector<32x256xf32> -> vector<256x32xf32>
    %9 = arith.truncf %8 : vector<256x32xf32> to vector<256x32xbf16>
    %10 = arith.truncf %7 : vector<32x256xf32> to vector<32x256xbf16>
    %cst = arith.constant dense<0.000000e+00> : vector<256x32xf32>
    %11 = tpu.matmul %9, %1, %cst {dimension_numbers = #tpu.dot_dimension_numbers<[1], [0], [0], [1], [0, 0, 1, 1], [], []>} : vector<256x32xbf16>, vector<32x32xbf16>, vector<256x32xf32> -> vector<256x32xf32>
    %12 = vector.broadcast %3 : vector<1x32xf32> to vector<256x32xf32>
    %13 = arith.addf %11, %12 : vector<256x32xf32>
    %14 = arith.truncf %13 : vector<256x32xf32> to vector<256x32xbf16>
    %cst_10 = arith.constant dense<0.000000e+00> : vector<256x256xf32>
    %15 = tpu.matmul %14, %10, %cst_10 {dimension_numbers = #tpu.dot_dimension_numbers<[1], [0], [0], [1], [0, 0, 1, 1], [], []>} : vector<256x32xbf16>, vector<32x256xbf16>, vector<256x256xf32> -> vector<256x256xf32>
    %cst_11 = arith.constant dense<0xFF800000> : vector<256xf32>
    %16 = vector.multi_reduction <maximumf>, %15, %cst_11 [1] : vector<256x256xf32> to vector<256xf32>
    %17 = vector.shape_cast %16 : vector<256xf32> to vector<256x1xf32>
    %18 = vector.broadcast %17 : vector<256x1xf32> to vector<256x256xf32>
    %19 = arith.subf %15, %18 : vector<256x256xf32>
    %20 = math.exp %19 : vector<256x256xf32>
    %cst_12 = arith.constant dense<0.000000e+00> : vector<256xf32>
    %21 = vector.multi_reduction <add>, %20, %cst_12 [1] : vector<256x256xf32> to vector<256xf32>
    %22 = vector.shape_cast %21 : vector<256xf32> to vector<256x1xf32>
    %cst_13 = arith.constant dense<0.000000e+00> : vector<256x32xf32>
    %23 = tpu.matmul %9, %2, %cst_13 {dimension_numbers = #tpu.dot_dimension_numbers<[1], [0], [0], [1], [0, 0, 1, 1], [], []>} : vector<256x32xbf16>, vector<32x32xbf16>, vector<256x32xf32> -> vector<256x32xf32>
    %24 = vector.broadcast %4 : vector<1x32xf32> to vector<256x32xf32>
    %25 = arith.addf %23, %24 : vector<256x32xf32>
    %26 = arith.truncf %20 : vector<256x256xf32> to vector<256x256xbf16>
    %27 = arith.truncf %25 : vector<256x32xf32> to vector<256x32xbf16>
    %cst_14 = arith.constant dense<0.000000e+00> : vector<256x32xf32>
    %28 = tpu.matmul %26, %27, %cst_14 {dimension_numbers = #tpu.dot_dimension_numbers<[1], [0], [0], [1], [0, 0, 1, 1], [], []>} : vector<256x256xbf16>, vector<256x32xbf16>, vector<256x32xf32> -> vector<256x32xf32>
    %29 = tpu.reciprocal %22 {approx = true} : vector<256x1xf32> -> vector<256x1xf32>
    %30 = vector.broadcast %0 : f32 to vector<256x1xf32>
    %31 = arith.mulf %30, %29 : vector<256x1xf32>
    %32 = vector.broadcast %31 : vector<256x1xf32> to vector<256x32xf32>
    %33 = arith.mulf %28, %32 : vector<256x32xf32>
    %34 = tpu.transpose %33, [1, 0] : vector<256x32xf32> -> vector<32x256xf32>
    %35 = arith.addf %34, %7 : vector<32x256xf32>
    %36 = arith.index_cast %c0_i32 : i32 to index
    %c0_15 = arith.constant 0 : index
    %c0_16 = arith.constant 0 : index
    %37 = vector.load %arg7[%36, %c0_15, %c0_16] : memref<1x32x256xf32, #tpu.memory_space<vmem>>, vector<1x32x256xf32>
    %38 = vector.shape_cast %37 : vector<1x32x256xf32> to vector<32x256xf32>
    %39 = vector.shape_cast %35 : vector<32x256xf32> to vector<1x32x256xf32>
    tpu.vector_store %arg7[%36, %c0_15, %c0_16], %39 {strides = array<i32>} : memref<1x32x256xf32, #tpu.memory_space<vmem>>, vector<1x32x256xf32>,
    %c1_i32 = arith.constant 1 : i32
    return
  }
  func.func @transform_0(%arg0: i32) -> (i32, i32, i32) {
    %c0_i32 = arith.constant 0 : i32
    %c0_i32_0 = arith.constant 0 : i32
    %c0_i32_1 = arith.constant 0 : i32
    return %arg0, %c0_i32, %c0_i32_0 : i32, i32, i32
  }
  func.func @transform_1(%arg0: i32) -> (i32, i32) {
    %c0_i32 = arith.constant 0 : i32
    %c0_i32_0 = arith.constant 0 : i32
    %c0_i32_1 = arith.constant 0 : i32
    return %c0_i32, %c0_i32_0 : i32, i32
  }
  func.func @transform_2(%arg0: i32) -> (i32, i32) {
    %c0_i32 = arith.constant 0 : i32
    %c0_i32_0 = arith.constant 0 : i32
    %c0_i32_1 = arith.constant 0 : i32
    return %c0_i32, %c0_i32_0 : i32, i32
  }
  func.func @transform_3(%arg0: i32) -> (i32, i32) {
    %c0_i32 = arith.constant 0 : i32
    %c0_i32_0 = arith.constant 0 : i32
    %c0_i32_1 = arith.constant 0 : i32
    return %c0_i32, %c0_i32_0 : i32, i32
  }
  func.func @transform_4(%arg0: i32) -> (i32, i32) {
    %c0_i32 = arith.constant 0 : i32
    %c0_i32_0 = arith.constant 0 : i32
    %c0_i32_1 = arith.constant 0 : i32
    return %c0_i32, %c0_i32_0 : i32, i32
  }
  func.func @transform_5(%arg0: i32) -> i32 {
    %c0_i32 = arith.constant 0 : i32
    %c0_i32_0 = arith.constant 0 : i32
    return %c0_i32 : i32
  }
  func.func @transform_6(%arg0: i32) -> (i32, i32, i32) {
    %c0_i32 = arith.constant 0 : i32
    %c0_i32_0 = arith.constant 0 : i32
    %c0_i32_1 = arith.constant 0 : i32
    return %arg0, %c0_i32, %c0_i32_0 : i32, i32, i32
  }
}

</mosaic_0001>

<llo_original>
// kernel: tpu_custom_call.1
$region0: #{tpu_custom_call.1}
  #allocation0 [shape = 'u32[]', space=smem, size = 0x4, offset = 0x4, fixed_abs, tag = 'smem constant byte address 0x4 - core index']
  #allocation1 [shape = 'u32[72,128]{1,0:T(1,128)}', space=vmem, size = 0x9000, scoped, tag = 'internal scratch']
  #allocation2 [shape = 'f32[1]{0:T(128)S(6)}', space=smem, size = 0x200, scoped, tag = 'scoped memory for tpu_custom_call.1']
  %s0 = inlined_call_operand.hbm [shape: f32[2,32,256], index: 0, kind: input, shape index: {}]
  %s1 = inlined_call_operand.hbm [shape: bf16[32,32], index: 1, kind: input, shape index: {}]
  %s2 = inlined_call_operand.vmem [shape: f32[1,32], index: 2, kind: input, shape index: {}]
  %s3 = inlined_call_operand.hbm [shape: bf16[32,32], index: 3, kind: input, shape index: {}]
  %s4 = inlined_call_operand.vmem [shape: f32[1,32], index: 4, kind: input, shape index: {}]
  %s5 = inlined_call_operand.<no memory space> [shape: f32[1], index: 5, kind: input, shape index: {}]
  %s6 = inlined_call_operand.hbm [shape: f32[2,32,256], index: 6, kind: output, shape index: {}]
  %s7 = sld [smem:[#allocation0]]
  $region69: #{tpu_custom_call.1} parent=0
    _
  %s9 = ssub.s32 1, %s7
  %s10 = scalar_select 0, %s9, %s7
  %11 = sst [smem:[#allocation2]] %s5
  $region1: #{tpu_custom_call.1} parent=0
    #allocation3 [shape = 'u8[65536]{0}', space=vmem, size = 0x10000, scoped, tag = 'input window, operand 0']
    #allocation4 [shape = 's32[2]{0}', space=sflag, size = 0x8, scoped, tag = 'scoped memory for tpu_custom_call.1']
    #allocation5 [shape = 's32[2]{0}', space=sflag, size = 0x8, scoped, tag = 'scoped memory for tpu_custom_call.1']
    #allocation6 [shape = 'u8[8192]{0}', space=vmem, size = 0x2000, scoped, tag = 'input window, operand 1, single buffered']
    #allocation7 [shape = 's32[1]{0}', space=sflag, size = 0x4, scoped, tag = 'scoped memory for tpu_custom_call.1']
    #allocation8 [shape = 'u8[8192]{0}', space=vmem, size = 0x2000, scoped, tag = 'input window, operand 3, single buffered']
    #allocation9 [shape = 'u8[65536]{0}', space=vmem, size = 0x10000, scoped, tag = 'output window, operand 0']
    %12 = vsyncpa [#allocation4], 0
    %s13 = scalar_lea.sflag [#allocation4], 1
    %14 = vsyncpa %s13, 0
    %15 = vsyncpa [#allocation7], 0
    %16 = vsyncpa [#allocation5], 0
    %s17 = scalar_lea.sflag [#allocation5], 1
    %18 = vsyncpa %s17, 0
    loop: start=0, step=1, limit=4
    $region2: #{tpu_custom_call.1} parent=1 // loop_pre_header
      _
    $region3: #{tpu_custom_call.1} parent=1 // loop_header
      %s20 = sphi 0, %s24
      %p21 = scmp.ge.s32.totalorder %s20, 4
      %s30 = sphi 0, %s32
      %s33 = sphi 0, %s30
      %s34 = sphi 0, %s33
      %s50 = sphi 0, %s34
      %s54 = sphi 0, %s54
      %s56 = sphi 0, %s54
      %s57 = sphi 0, %s56
      %s71 = sphi 0, %s57
      %s75 = sphi 0, %s75
      %s77 = sphi 0, %s75
      %s78 = sphi 0, %s77
      %s92 = sphi 0, %s78
      %s96 = sphi 0, %s96
      %s98 = sphi 0, %s96
      %s99 = sphi 0, %s98
      %s113 = sphi 0, %s99
      %s117 = sphi 0, %s117
      %s119 = sphi 0, %s117
      %s120 = sphi 0, %s119
      %s134 = sphi 0, %s120
      %s138 = sphi 0, %s138
      %s140 = sphi 0, %s138
      %s141 = sphi 0, %s140
      %s155 = sphi 0, %s141
      %s161 = sphi 0, %s163
      %s164 = sphi 0, %s161
      %s165 = sphi 0, %s164
      %s181 = sphi 0, %s165
    $region4: #{tpu_custom_call.1} parent=1 // loop_header_branch
      %23 = sbr.rel (%p21) target = $region8
    $region5: #{tpu_custom_call.1} parent=1 // loop_body
      %s25 = ssub.s32 %s20, 1
      %s26 = ssub.s32 %s20, 2
      %s27 = sadd.s32 %s20, 1
      %s28 = ssub.s32 %s20, %s27
      %p29 = scmp.eq.s32.totalorder %s28, 0
      %s31 = sadd.s32 %s30, 1
      %s32 = scalar_select %p29, %s30, %s31
      %p35 = pneg %p29
      %p36 = scmp.eq.s32.totalorder %s20, 1
      %p37 = por %p35, %p36
      %p38 = scmp.ne.s32.totalorder %s30, %s33
      %p39 = scmp.eq.s32.totalorder %s20, 0
      %p40 = por %p38, %p39
      %p41 = scmp.ne.s32.totalorder %s30, %s33
      %p42 = scmp.eq.s32.totalorder %s25, 1
      %p43 = por %p41, %p42
      %p44 = scmp.ne.s32.totalorder %s33, %s34
      %p45 = scmp.eq.s32.totalorder %s25, 0
      %p46 = por %p44, %p45
      %p47 = scmp.ne.s32.totalorder %s33, %s34
      %p48 = scmp.eq.s32.totalorder %s26, 1
      %p49 = por %p47, %p48
      %p51 = scmp.ne.s32.totalorder %s34, %s50
      %p52 = scmp.eq.s32.totalorder %s26, 0
      %p53 = por %p51, %p52
      %s55 = sadd.s32 %s54, 1
      %p58 = scmp.eq.s32.totalorder %s20, 1
      %p59 = scmp.ne.s32.totalorder %s54, %s56
      %p60 = scmp.eq.s32.totalorder %s20, 0
      %p61 = por %p59, %p60
      %p62 = scmp.ne.s32.totalorder %s54, %s56
      %p63 = scmp.eq.s32.totalorder %s25, 1
      %p64 = por %p62, %p63
      %p65 = scmp.ne.s32.totalorder %s56, %s57
      %p66 = scmp.eq.s32.totalorder %s25, 0
      %p67 = por %p65, %p66
      %p68 = scmp.ne.s32.totalorder %s56, %s57
      %p69 = scmp.eq.s32.totalorder %s26, 1
      %p70 = por %p68, %p69
      %p72 = scmp.ne.s32.totalorder %s57, %s71
      %p73 = scmp.eq.s32.totalorder %s26, 0
      %p74 = por %p72, %p73
      %s76 = sadd.s32 %s75, 1
      %p79 = scmp.eq.s32.totalorder %s20, 1
      %p80 = scmp.ne.s32.totalorder %s75, %s77
      %p81 = scmp.eq.s32.totalorder %s20, 0
      %p82 = por %p80, %p81
      %p83 = scmp.ne.s32.totalorder %s75, %s77
      %p84 = scmp.eq.s32.totalorder %s25, 1
      %p85 = por %p83, %p84
      %p86 = scmp.ne.s32.totalorder %s77, %s78
      %p87 = scmp.eq.s32.totalorder %s25, 0
      %p88 = por %p86, %p87
      %p89 = scmp.ne.s32.totalorder %s77, %s78
      %p90 = scmp.eq.s32.totalorder %s26, 1
      %p91 = por %p89, %p90
      %p93 = scmp.ne.s32.totalorder %s78, %s92
      %p94 = scmp.eq.s32.totalorder %s26, 0
      %p95 = por %p93, %p94
      %s97 = sadd.s32 %s96, 1
      %p100 = scmp.eq.s32.totalorder %s20, 1
      %p101 = scmp.ne.s32.totalorder %s96, %s98
      %p102 = scmp.eq.s32.totalorder %s20, 0
      %p103 = por %p101, %p102
      %p104 = scmp.ne.s32.totalorder %s96, %s98
      %p105 = scmp.eq.s32.totalorder %s25, 1
      %p106 = por %p104, %p105
      %p107 = scmp.ne.s32.totalorder %s98, %s99
      %p108 = scmp.eq.s32.totalorder %s25, 0
      %p109 = por %p107, %p108
      %p110 = scmp.ne.s32.totalorder %s98, %s99
      %p111 = scmp.eq.s32.totalorder %s26, 1
      %p112 = por %p110, %p111
      %p114 = scmp.ne.s32.totalorder %s99, %s113
      %p115 = scmp.eq.s32.totalorder %s26, 0
      %p116 = por %p114, %p115
      %s118 = sadd.s32 %s117, 1
      %p121 = scmp.eq.s32.totalorder %s20, 1
      %p122 = scmp.ne.s32.totalorder %s117, %s119
      %p123 = scmp.eq.s32.totalorder %s20, 0
      %p124 = por %p122, %p123
      %p125 = scmp.ne.s32.totalorder %s117, %s119
      %p126 = scmp.eq.s32.totalorder %s25, 1
      %p127 = por %p125, %p126
      %p128 = scmp.ne.s32.totalorder %s119, %s120
      %p129 = scmp.eq.s32.totalorder %s25, 0
      %p130 = por %p128, %p129
      %p131 = scmp.ne.s32.totalorder %s119, %s120
      %p132 = scmp.eq.s32.totalorder %s26, 1
      %p133 = por %p131, %p132
      %p135 = scmp.ne.s32.totalorder %s120, %s134
      %p136 = scmp.eq.s32.totalorder %s26, 0
      %p137 = por %p135, %p136
      %s139 = sadd.s32 %s138, 1
      %p142 = scmp.eq.s32.totalorder %s20, 1
      %p143 = scmp.ne.s32.totalorder %s138, %s140
      %p144 = scmp.eq.s32.totalorder %s20, 0
      %p145 = por %p143, %p144
      %p146 = scmp.ne.s32.totalorder %s138, %s140
      %p147 = scmp.eq.s32.totalorder %s25, 1
      %p148 = por %p146, %p147
      %p149 = scmp.ne.s32.totalorder %s140, %s141
      %p150 = scmp.eq.s32.totalorder %s25, 0
      %p151 = por %p149, %p150
      %p152 = scmp.ne.s32.totalorder %s140, %s141
      %p153 = scmp.eq.s32.totalorder %s26, 1
      %p154 = por %p152, %p153
      %p156 = scmp.ne.s32.totalorder %s141, %s155
      %p157 = scmp.eq.s32.totalorder %s26, 0
      %p158 = por %p156, %p157
      %s159 = ssub.s32 %s20, %s27
      %p160 = scmp.eq.s32.totalorder %s159, 0
      %s162 = sadd.s32 %s161, 1
      %s163 = scalar_select %p160, %s161, %s162
      %p166 = pneg %p160
      %p167 = scmp.eq.s32.totalorder %s20, 1
      %p168 = por %p166, %p167
      %p169 = scmp.ne.s32.totalorder %s161, %s164
      %p170 = scmp.eq.s32.totalorder %s20, 0
      %p171 = por %p169, %p170
      %p172 = scmp.ne.s32.totalorder %s161, %s164
      %p173 = scmp.eq.s32.totalorder %s25, 1
      %p174 = por %p172, %p173
      %p175 = scmp.ne.s32.totalorder %s164, %s165
      %p176 = scmp.eq.s32.totalorder %s25, 0
      %p177 = por %p175, %p176
      %p178 = scmp.ne.s32.totalorder %s164, %s165
      %p179 = scmp.eq.s32.totalorder %s26, 1
      %p180 = por %p178, %p179
      %p182 = scmp.ne.s32.totalorder %s165, %s181
      %p183 = scmp.eq.s32.totalorder %s26, 0
      %p184 = por %p182, %p183
      %p185 = scmp.le.s32.totalorder 1, %s20
      %p186 = scmp.lt.s32.totalorder %s20, 3
      %p187 = pnand %p185, %p186
      %p188 = pneg %p187
      // Predicated region
      $region9: #{tpu_custom_call.1} parent=5 // pred_check
        _
      $region10: #{tpu_custom_call.1} parent=5 // pred_check_branch
        %190 = sbr.rel (%p187) target = $region12
      $region11: #{tpu_custom_call.1} parent=5 // pred_region
        %s191 = ssub.s32 %s20, 1
        // Predicated region
        $region13: #{tpu_custom_call.1} parent=11 // pred_check
          %p192 = pneg %p67
        $region14: #{tpu_custom_call.1} parent=11 // pred_check_branch
          %194 = sbr.rel (%p192) target = $region16
        $region15: #{tpu_custom_call.1} parent=11 // pred_region
          %196 = vsyncadd [#allocation7], 0
          %s197 = sshll.u32 %s1, 4
          %s198 = int_to_ptr.hbm [resolvable:$true] %s197
          %s199 = sshll.u32 [#allocation6], 4
          %s200 = int_to_ptr.vmem [resolvable:$true] %s199
          %205 = dma.hbm_to_vmem [thread:$0]  %s198, 256, %s200, [#allocation7], 64, 64, 4
        $region16: #{tpu_custom_call.1} parent=11 // pred_fallthru
          _
        // Predicated region
        $region17: #{tpu_custom_call.1} parent=11 // pred_check
          %p206 = pneg %p88
        $region18: #{tpu_custom_call.1} parent=11 // pred_check_branch
          %208 = sbr.rel (%p206) target = $region20
        $region19: #{tpu_custom_call.1} parent=11 // pred_region
          _
        $region20: #{tpu_custom_call.1} parent=11 // pred_fallthru
          _
        // Predicated region
        $region21: #{tpu_custom_call.1} parent=11 // pred_check
          %p209 = pneg %p109
        $region22: #{tpu_custom_call.1} parent=11 // pred_check_branch
          %211 = sbr.rel (%p209) target = $region24
        $region23: #{tpu_custom_call.1} parent=11 // pred_region
          %213 = vsyncadd [#allocation7], 0
          %s214 = sshll.u32 %s3, 4
          %s215 = int_to_ptr.hbm [resolvable:$true] %s214
          %s216 = sshll.u32 [#allocation8], 4
          %s217 = int_to_ptr.vmem [resolvable:$true] %s216
          %222 = dma.hbm_to_vmem [thread:$0]  %s215, 256, %s217, [#allocation7], 64, 64, 4
        $region24: #{tpu_custom_call.1} parent=11 // pred_fallthru
          _
        // Predicated region
        $region25: #{tpu_custom_call.1} parent=11 // pred_check
          %p223 = pneg %p130
        $region26: #{tpu_custom_call.1} parent=11 // pred_check_branch
          %225 = sbr.rel (%p223) target = $region28
        $region27: #{tpu_custom_call.1} parent=11 // pred_region
          _
        $region28: #{tpu_custom_call.1} parent=11 // pred_fallthru
          _
        // Predicated region
        $region29: #{tpu_custom_call.1} parent=11 // pred_check
          %p226 = pneg %p151
        $region30: #{tpu_custom_call.1} parent=11 // pred_check_branch
          %228 = sbr.rel (%p226) target = $region32
        $region31: #{tpu_custom_call.1} parent=11 // pred_region
          _
        $region32: #{tpu_custom_call.1} parent=11 // pred_fallthru
          _
      $region12: #{tpu_custom_call.1} parent=5 // pred_fallthru
        _
      %p229 = scmp.lt.s32.totalorder %s20, 2
      // Predicated region
      $region33: #{tpu_custom_call.1} parent=5 // pred_check
        %p230 = pneg %p229
      $region34: #{tpu_custom_call.1} parent=5 // pred_check_branch
        %232 = sbr.rel (%p230) target = $region36
      $region35: #{tpu_custom_call.1} parent=5 // pred_region
        // Predicated region
        $region37: #{tpu_custom_call.1} parent=35 // pred_check
          %p233 = pneg %p40
        $region38: #{tpu_custom_call.1} parent=35 // pred_check_branch
          %235 = sbr.rel (%p233) target = $region40
        $region39: #{tpu_custom_call.1} parent=35 // pred_region
          %s236 = sand.u32 %s30, 1
          %s237 = scalar_lea.sflag [#allocation4], %s236
          %s238 = sand.u32 %s30, 1
          %s239 = smul.addr %s238, 64
          %s240 = scalar_lea.vmem [#allocation3], %s239
          %242 = vsyncadd %s237, 0
          %s243 = smul.addr %s20, 8
          %s244 = smul.addr %s243, 8
          %s245 = scalar_lea.hbm %s0, %s244
          %s246 = sshll.u32 %s245, 4
          %s247 = int_to_ptr.hbm [resolvable:$true] %s246
          %s248 = sshll.u32 %s240, 4
          %s249 = int_to_ptr.vmem [resolvable:$true] %s248
          %254 = dma.hbm_to_vmem [thread:$0]  %s247, 1024, %s249, %s237, 256, 256, 16
        $region40: #{tpu_custom_call.1} parent=35 // pred_fallthru
          _
      $region36: #{tpu_custom_call.1} parent=5 // pred_fallthru
        _
      %p255 = scmp.le.s32.totalorder 1, %s20
      %p256 = scmp.lt.s32.totalorder %s20, 3
      %p257 = pnand %p255, %p256
      %p258 = pneg %p257
      // Predicated region
      $region41: #{tpu_custom_call.1} parent=5 // pred_check
        _
      $region42: #{tpu_custom_call.1} parent=5 // pred_check_branch
        %260 = sbr.rel (%p257) target = $region44
      $region43: #{tpu_custom_call.1} parent=5 // pred_region
        %s261 = ssub.s32 %s20, 1
        %s262 = sand.u32 %s33, 1
        %s263 = scalar_lea.sflag [#allocation4], %s262
        %s264 = sand.u32 %s33, 1
        %s265 = smul.addr %s264, 64
        %s266 = scalar_lea.vmem [#allocation3], %s265
        // Predicated region
        $region45: #{tpu_custom_call.1} parent=43 // pred_check
          %p267 = pneg %p46
        $region46: #{tpu_custom_call.1} parent=43 // pred_check_branch
          %269 = sbr.rel (%p267) target = $region48
        $region47: #{tpu_custom_call.1} parent=43 // pred_region
          %271 = dma.done %s263, 1024
        $region48: #{tpu_custom_call.1} parent=43 // pred_fallthru
          _
        // Predicated region
        $region49: #{tpu_custom_call.1} parent=43 // pred_check
          %p272 = pneg %p67
        $region50: #{tpu_custom_call.1} parent=43 // pred_check_branch
          %274 = sbr.rel (%p272) target = $region52
        $region51: #{tpu_custom_call.1} parent=43 // pred_region
          %276 = dma.done [#allocation7], 256
        $region52: #{tpu_custom_call.1} parent=43 // pred_fallthru
          _
        // Predicated region
        $region53: #{tpu_custom_call.1} parent=43 // pred_check
          %p277 = pneg %p109
        $region54: #{tpu_custom_call.1} parent=43 // pred_check_branch
          %279 = sbr.rel (%p277) target = $region56
        $region55: #{tpu_custom_call.1} parent=43 // pred_region
          %281 = dma.done [#allocation7], 256
        $region56: #{tpu_custom_call.1} parent=43 // pred_fallthru
          _
        %s282 = sand.u32 %s33, 1
        %s283 = scalar_lea.sflag [#allocation4], %s282
        %s284 = sand.u32 %s33, 1
        %s285 = smul.addr %s284, 64
        %s286 = scalar_lea.vmem [#allocation3], %s285
        %p287 = pneg %p46
        %p288 = pneg %p43
        %p289 = pneg %p67
        %p290 = pneg %p64
        %p291 = pneg %p88
        %p292 = pneg %p85
        %p293 = pneg %p109
        %p294 = pneg %p106
        %p295 = pneg %p130
        %p296 = pneg %p127
        %p297 = pneg %p151
        %p298 = pneg %p148
        %p299 = pneg %p177
        %p300 = pneg %p174
        %s301 = sand.u32 %s164, 1
        %s302 = scalar_lea.sflag [#allocation5], %s301
        %s303 = sand.u32 %s164, 1
        %s304 = smul.addr %s303, 64
        %s305 = scalar_lea.vmem [#allocation9], %s304
        %s307 = sld [smem:[#allocation2]]
        %v308 = vld [vmem:[#allocation6] sm:$0xf]
        %v309 = vld [vmem:[#allocation6 + $0x4] sm:$0xf]
        %v310 = vld [vmem:[#allocation6 + $0x8] sm:$0xf]
        %v311 = vld [vmem:[#allocation6 + $0xc] sm:$0xf]
        %v312 = vld [vmem:[#allocation8] sm:$0xf]
        %v313 = vld [vmem:[#allocation8 + $0x4] sm:$0xf]
        %v314 = vld [vmem:[#allocation8 + $0x8] sm:$0xf]
        %v315 = vld [vmem:[#allocation8 + $0xc] sm:$0xf]
        %v316 = vld [vmem:[%s2] sm:$0x1]
        %v317 = vld [vmem:[%s4] sm:$0x1]
        %v318 = vld [vmem:[%s266] sm:$0xff]
        %v319 = vld [vmem:[%s266 + $0x8] sm:$0xff]
        %v320 = vld [vmem:[%s266 + $0x10] sm:$0xff]
        %v321 = vld [vmem:[%s266 + $0x18] sm:$0xff]
        %v322 = vld [vmem:[%s266 + $0x20] sm:$0xff]
        %v323 = vld [vmem:[%s266 + $0x28] sm:$0xff]
        %v324 = vld [vmem:[%s266 + $0x30] sm:$0xff]
        %v325 = vld [vmem:[%s266 + $0x38] sm:$0xff]
        %326 = vxpose.xlu0.b32.start [1/16] %v318, 128
        %327 = vxpose.xlu0.b32.cont [2/16] %v320, 128
        %328 = vxpose.xlu0.b32.cont [3/16] %v322, 128
        %329 = vxpose.xlu0.b32.cont [4/16] %v324, 128
        %330 = vxpose.xlu0.b32.cont [5/16] 0.0, 128
        %331 = vxpose.xlu0.b32.cont [6/16] 0.0, 128
        %332 = vxpose.xlu0.b32.cont [7/16] 0.0, 128
        %333 = vxpose.xlu0.b32.cont [8/16] 0.0, 128
        %334 = vxpose.xlu0.b32.cont [9/16] 0.0, 128
        %335 = vxpose.xlu0.b32.cont [10/16] 0.0, 128
        %336 = vxpose.xlu0.b32.cont [11/16] 0.0, 128
        %337 = vxpose.xlu0.b32.cont [12/16] 0.0, 128
        %338 = vxpose.xlu0.b32.cont [13/16] 0.0, 128
        %339 = vxpose.xlu0.b32.cont [14/16] 0.0, 128
        %340 = vxpose.xlu0.b32.cont [15/16] 0.0, 128
        %341 = vxpose.xlu0.b32.end [16/16] 0.0, 128
        %v342 = vpop.trf.xlu0
        %v343 = vpop.trf.xlu0
        %v344 = vpop.trf.xlu0
        %v345 = vpop.trf.xlu0
        %v346 = vpop.trf.xlu0
        %v347 = vpop.trf.xlu0
        %v348 = vpop.trf.xlu0
        %v349 = vpop.trf.xlu0
        %v350 = vpop.trf.xlu0
        %v351 = vpop.trf.xlu0
        %v352 = vpop.trf.xlu0
        %v353 = vpop.trf.xlu0
        %v354 = vpop.trf.xlu0
        %v355 = vpop.trf.xlu0
        %v356 = vpop.trf.xlu0
        %v357 = vpop.trf.xlu0
        %358 = vxpose.xlu0.b32.start [1/16] %v319, 128
        %359 = vxpose.xlu0.b32.cont [2/16] %v321, 128
        %360 = vxpose.xlu0.b32.cont [3/16] %v323, 128
        %361 = vxpose.xlu0.b32.cont [4/16] %v325, 128
        %362 = vxpose.xlu0.b32.cont [5/16] 0.0, 128
        %363 = vxpose.xlu0.b32.cont [6/16] 0.0, 128
        %364 = vxpose.xlu0.b32.cont [7/16] 0.0, 128
        %365 = vxpose.xlu0.b32.cont [8/16] 0.0, 128
        %366 = vxpose.xlu0.b32.cont [9/16] 0.0, 128
        %367 = vxpose.xlu0.b32.cont [10/16] 0.0, 128
        %368 = vxpose.xlu0.b32.cont [11/16] 0.0, 128
        %369 = vxpose.xlu0.b32.cont [12/16] 0.0, 128
        %370 = vxpose.xlu0.b32.cont [13/16] 0.0, 128
        %371 = vxpose.xlu0.b32.cont [14/16] 0.0, 128
        %372 = vxpose.xlu0.b32.cont [15/16] 0.0, 128
        %373 = vxpose.xlu0.b32.end [16/16] 0.0, 128
        %v374 = vpop.trf.xlu0
        %v375 = vpop.trf.xlu0
        %v376 = vpop.trf.xlu0
        %v377 = vpop.trf.xlu0
        %v378 = vpop.trf.xlu0
        %v379 = vpop.trf.xlu0
        %v380 = vpop.trf.xlu0
        %v381 = vpop.trf.xlu0
        %v382 = vpop.trf.xlu0
        %v383 = vpop.trf.xlu0
        %v384 = vpop.trf.xlu0
        %v385 = vpop.trf.xlu0
        %v386 = vpop.trf.xlu0
        %v387 = vpop.trf.xlu0
        %v388 = vpop.trf.xlu0
        %v389 = vpop.trf.xlu0
        %v390 = vpack.c.bf16 %v343, %v342
        %v391 = vpack.c.bf16 %v345, %v344
        %v392 = vpack.c.bf16 %v347, %v346
        %v393 = vpack.c.bf16 %v349, %v348
        %v394 = vpack.c.bf16 %v351, %v350
        %v395 = vpack.c.bf16 %v353, %v352
        %v396 = vpack.c.bf16 %v355, %v354
        %v397 = vpack.c.bf16 %v357, %v356
        %v398 = vpack.c.bf16 %v375, %v374
        %v399 = vpack.c.bf16 %v377, %v376
        %v400 = vpack.c.bf16 %v379, %v378
        %v401 = vpack.c.bf16 %v381, %v380
        %v402 = vpack.c.bf16 %v383, %v382
        %v403 = vpack.c.bf16 %v385, %v384
        %v404 = vpack.c.bf16 %v387, %v386
        %v405 = vpack.c.bf16 %v389, %v388
        %v406 = vpack.c.bf16 %v320, %v318
        %v407 = vpack.c.bf16 %v321, %v319
        %v408 = vpack.c.bf16 %v324, %v322
        %v409 = vpack.c.bf16 %v325, %v323
        %v411 = vperm.slane %v316, 0
        %v417 = vunpack.c.l.b16 %v308
        %v418 = vunpack.c.l.b16 %v309
        %v419 = vunpack.c.l.b16 %v310
        %v420 = vunpack.c.l.b16 %v311
        %v421 = vpack.c.b16 %v418, %v417
        %v422 = vpack.c.b16 %v420, %v419
        %vm425 = vcmask 261120
        %v427 = vsel %vm425, %v390, 0
        %v430 = vsel %vm425, %v391, 0
        %v433 = vsel %vm425, %v392, 0
        %v436 = vsel %vm425, %v393, 0
        %v439 = vsel %vm425, %v394, 0
        %v442 = vsel %vm425, %v395, 0
        %v445 = vsel %vm425, %v396, 0
        %v448 = vsel %vm425, %v397, 0
        %v451 = vsel %vm425, %v398, 0
        %v454 = vsel %vm425, %v399, 0
        %v457 = vsel %vm425, %v400, 0
        %v460 = vsel %vm425, %v401, 0
        %v463 = vsel %vm425, %v402, 0
        %v466 = vsel %vm425, %v403, 0
        %v469 = vsel %vm425, %v404, 0
        %v472 = vsel %vm425, %v405, 0
        %474 = vmatpush.bf16.msra.mxu0 0
        %475 = vmatpush.bf16.msra.mxu0 0
        %476 = vmatpush.bf16.msra.mxu0 0
        %477 = vmatpush.bf16.msra.mxu0 0
        %478 = vmatpush.bf16.msra.mxu0 0
        %479 = vmatpush.bf16.msra.mxu0 0
        %480 = vmatpush.bf16.msra.mxu0 %v422
        %481 = vmatpush.bf16.msra.mxu0 %v421
        %482 = vmatmul.bf16.gmra.mxu0 %v427
        %v483 = vpop.f32.mrf.mxu0
        %v484 = vadd.f32 %v411, %v483
        %v485 = vpop.f32.mrf.mxu0
        %v486 = vadd.f32 %v411, %v485
        %487 = vmatmul.bf16.gmra.mxu0 %v430
        %v488 = vpop.f32.mrf.mxu0
        %v489 = vadd.f32 %v411, %v488
        %v490 = vpop.f32.mrf.mxu0
        %v491 = vadd.f32 %v411, %v490
        %492 = vmatmul.bf16.gmra.mxu0 %v433
        %v493 = vpop.f32.mrf.mxu0
        %v494 = vadd.f32 %v411, %v493
        %v495 = vpop.f32.mrf.mxu0
        %v496 = vadd.f32 %v411, %v495
        %497 = vmatmul.bf16.gmra.mxu0 %v436
        %v498 = vpop.f32.mrf.mxu0
        %v499 = vadd.f32 %v411, %v498
        %v500 = vpop.f32.mrf.mxu0
        %v501 = vadd.f32 %v411, %v500
        %502 = vmatmul.bf16.gmra.mxu0 %v439
        %v503 = vpop.f32.mrf.mxu0
        %v504 = vadd.f32 %v411, %v503
        %v505 = vpop.f32.mrf.mxu0
        %v506 = vadd.f32 %v411, %v505
        %507 = vmatmul.bf16.gmra.mxu0 %v442
        %v508 = vpop.f32.mrf.mxu0
        %v509 = vadd.f32 %v411, %v508
        %v510 = vpop.f32.mrf.mxu0
        %v511 = vadd.f32 %v411, %v510
        %512 = vmatmul.bf16.gmra.mxu0 %v445
        %v513 = vpop.f32.mrf.mxu0
        %v514 = vadd.f32 %v411, %v513
        %v515 = vpop.f32.mrf.mxu0
        %v516 = vadd.f32 %v411, %v515
        %517 = vmatmul.bf16.gmra.mxu0 %v448
        %v518 = vpop.f32.mrf.mxu0
        %v519 = vadd.f32 %v411, %v518
        %v520 = vpop.f32.mrf.mxu0
        %v521 = vadd.f32 %v411, %v520
        %522 = vmatmul.bf16.gmra.mxu0 %v451
        %v523 = vpop.f32.mrf.mxu0
        %v524 = vadd.f32 %v411, %v523
        %v525 = vpop.f32.mrf.mxu0
        %v526 = vadd.f32 %v411, %v525
        %527 = vmatmul.bf16.gmra.mxu0 %v454
        %v528 = vpop.f32.mrf.mxu0
        %v529 = vadd.f32 %v411, %v528
        %v530 = vpop.f32.mrf.mxu0
        %v531 = vadd.f32 %v411, %v530
        %532 = vmatmul.bf16.gmra.mxu0 %v457
        %v533 = vpop.f32.mrf.mxu0
        %v534 = vadd.f32 %v411, %v533
        %v535 = vpop.f32.mrf.mxu0
        %v536 = vadd.f32 %v411, %v535
        %537 = vmatmul.bf16.gmra.mxu0 %v460
        %v538 = vpop.f32.mrf.mxu0
        %v539 = vadd.f32 %v411, %v538
        %v540 = vpop.f32.mrf.mxu0
        %v541 = vadd.f32 %v411, %v540
        %542 = vmatmul.bf16.gmra.mxu0 %v463
        %v543 = vpop.f32.mrf.mxu0
        %v544 = vadd.f32 %v411, %v543
        %v545 = vpop.f32.mrf.mxu0
        %v546 = vadd.f32 %v411, %v545
        %547 = vmatmul.bf16.gmra.mxu0 %v466
        %v548 = vpop.f32.mrf.mxu0
        %v549 = vadd.f32 %v411, %v548
        %v550 = vpop.f32.mrf.mxu0
        %v551 = vadd.f32 %v411, %v550
        %552 = vmatmul.bf16.gmra.mxu0 %v469
        %v553 = vpop.f32.mrf.mxu0
        %v554 = vadd.f32 %v411, %v553
        %v555 = vpop.f32.mrf.mxu0
        %v556 = vadd.f32 %v411, %v555
        %557 = vmatmul.bf16.gmra.mxu0 %v472
        %v558 = vpop.f32.mrf.mxu0
        %v559 = vadd.f32 %v411, %v558
        %v560 = vpop.f32.mrf.mxu0
        %v561 = vadd.f32 %v411, %v560
        %562 = vdwg.mxu0
        %v563 = vpack.c.bf16 %v486, %v484
        %v564 = vpack.c.bf16 %v491, %v489
        %v565 = vpack.c.bf16 %v496, %v494
        %v566 = vpack.c.bf16 %v501, %v499
        %v567 = vpack.c.bf16 %v506, %v504
        %v568 = vpack.c.bf16 %v511, %v509
        %v569 = vpack.c.bf16 %v516, %v514
        %v570 = vpack.c.bf16 %v521, %v519
        %v571 = vpack.c.bf16 %v526, %v524
        %v572 = vpack.c.bf16 %v531, %v529
        %v573 = vpack.c.bf16 %v536, %v534
        %v574 = vpack.c.bf16 %v541, %v539
        %v575 = vpack.c.bf16 %v546, %v544
        %v576 = vpack.c.bf16 %v551, %v549
        %v577 = vpack.c.bf16 %v556, %v554
        %v578 = vpack.c.bf16 %v561, %v559
        %v580 = vsel %vm425, %v563, 0
        %v583 = vsel %vm425, %v564, 0
        %v586 = vsel %vm425, %v565, 0
        %v589 = vsel %vm425, %v566, 0
        %v592 = vsel %vm425, %v567, 0
        %v595 = vsel %vm425, %v568, 0
        %v598 = vsel %vm425, %v569, 0
        %v601 = vsel %vm425, %v570, 0
        %v604 = vsel %vm425, %v571, 0
        %v607 = vsel %vm425, %v572, 0
        %v610 = vsel %vm425, %v573, 0
        %v613 = vsel %vm425, %v574, 0
        %v616 = vsel %vm425, %v575, 0
        %v619 = vsel %vm425, %v576, 0
        %v622 = vsel %vm425, %v577, 0
        %v625 = vsel %vm425, %v578, 0
        %627 = vmatpush.bf16.msra.mxu0 0
        %628 = vmatpush.bf16.msra.mxu0 0
        %629 = vmatpush.bf16.msra.mxu0 0
        %630 = vmatpush.bf16.msra.mxu0 0
        %631 = vmatpush.bf16.msra.mxu0 0
        %632 = vmatpush.bf16.msra.mxu0 0
        %633 = vmatpush.bf16.msra.mxu0 %v408
        %634 = vmatpush.bf16.msra.mxu0 %v406
        %635 = vmatmul.bf16.gmra.mxu0 %v580
        %v636 = vpop.f32.mrf.mxu0
        %v637 = vadd.f32 0.0, %v636
        %v638 = vpop.f32.mrf.mxu0
        %v639 = vadd.f32 0.0, %v638
        %640 = vmatmul.bf16.gmra.mxu0 %v583
        %v641 = vpop.f32.mrf.mxu0
        %v642 = vadd.f32 0.0, %v641
        %v643 = vpop.f32.mrf.mxu0
        %v644 = vadd.f32 0.0, %v643
        %645 = vmatmul.bf16.gmra.mxu0 %v586
        %v646 = vpop.f32.mrf.mxu0
        %v647 = vadd.f32 0.0, %v646
        %v648 = vpop.f32.mrf.mxu0
        %v649 = vadd.f32 0.0, %v648
        %650 = vmatmul.bf16.gmra.mxu0 %v589
        %v651 = vpop.f32.mrf.mxu0
        %v652 = vadd.f32 0.0, %v651
        %v653 = vpop.f32.mrf.mxu0
        %v654 = vadd.f32 0.0, %v653
        %655 = vmatmul.bf16.gmra.mxu0 %v592
        %v656 = vpop.f32.mrf.mxu0
        %v657 = vadd.f32 0.0, %v656
        %v658 = vpop.f32.mrf.mxu0
        %v659 = vadd.f32 0.0, %v658
        %660 = vmatmul.bf16.gmra.mxu0 %v595
        %v661 = vpop.f32.mrf.mxu0
        %v662 = vadd.f32 0.0, %v661
        %v663 = vpop.f32.mrf.mxu0
        %v664 = vadd.f32 0.0, %v663
        %665 = vmatmul.bf16.gmra.mxu0 %v598
        %v666 = vpop.f32.mrf.mxu0
        %v667 = vadd.f32 0.0, %v666
        %v668 = vpop.f32.mrf.mxu0
        %v669 = vadd.f32 0.0, %v668
        %670 = vmatmul.bf16.gmra.mxu0 %v601
        %v671 = vpop.f32.mrf.mxu0
        %v672 = vadd.f32 0.0, %v671
        %v673 = vpop.f32.mrf.mxu0
        %v674 = vadd.f32 0.0, %v673
        %675 = vmatmul.bf16.gmra.mxu0 %v604
        %v676 = vpop.f32.mrf.mxu0
        %v677 = vadd.f32 0.0, %v676
        %v678 = vpop.f32.mrf.mxu0
        %v679 = vadd.f32 0.0, %v678
        %680 = vmatmul.bf16.gmra.mxu0 %v607
        %v681 = vpop.f32.mrf.mxu0
        %v682 = vadd.f32 0.0, %v681
        %v683 = vpop.f32.mrf.mxu0
        %v684 = vadd.f32 0.0, %v683
        %685 = vmatmul.bf16.gmra.mxu0 %v610
        %v686 = vpop.f32.mrf.mxu0
        %v687 = vadd.f32 0.0, %v686
        %v688 = vpop.f32.mrf.mxu0
        %v689 = vadd.f32 0.0, %v688
        %690 = vmatmul.bf16.gmra.mxu0 %v613
        %v691 = vpop.f32.mrf.mxu0
        %v692 = vadd.f32 0.0, %v691
        %v693 = vpop.f32.mrf.mxu0
        %v694 = vadd.f32 0.0, %v693
        %695 = vmatmul.bf16.gmra.mxu0 %v616
        %v696 = vpop.f32.mrf.mxu0
        %v697 = vadd.f32 0.0, %v696
        %v698 = vpop.f32.mrf.mxu0
        %v699 = vadd.f32 0.0, %v698
        %700 = vmatmul.bf16.gmra.mxu0 %v619
        %v701 = vpop.f32.mrf.mxu0
        %v702 = vadd.f32 0.0, %v701
        %v703 = vpop.f32.mrf.mxu0
        %v704 = vadd.f32 0.0, %v703
        %705 = vmatmul.bf16.gmra.mxu0 %v622
        %v706 = vpop.f32.mrf.mxu0
        %v707 = vadd.f32 0.0, %v706
        %v708 = vpop.f32.mrf.mxu0
        %v709 = vadd.f32 0.0, %v708
        %710 = vmatmul.bf16.gmra.mxu0 %v625
        %v711 = vpop.f32.mrf.mxu0
        %v712 = vadd.f32 0.0, %v711
        %v713 = vpop.f32.mrf.mxu0
        %v714 = vadd.f32 0.0, %v713
        %715 = vdwg.mxu0
        %716 = vmatpush.bf16.msra.mxu0 0
        %717 = vmatpush.bf16.msra.mxu0 0
        %718 = vmatpush.bf16.msra.mxu0 0
        %719 = vmatpush.bf16.msra.mxu0 0
        %720 = vmatpush.bf16.msra.mxu0 0
        %721 = vmatpush.bf16.msra.mxu0 0
        %722 = vmatpush.bf16.msra.mxu0 %v409
        %723 = vmatpush.bf16.msra.mxu0 %v407
        %724 = vmatmul.bf16.gmra.mxu0 %v580
        %v725 = vpop.f32.mrf.mxu0
        %v726 = vadd.f32 0.0, %v725
        %v727 = vpop.f32.mrf.mxu0
        %v728 = vadd.f32 0.0, %v727
        %729 = vmatmul.bf16.gmra.mxu0 %v583
        %v730 = vpop.f32.mrf.mxu0
        %v731 = vadd.f32 0.0, %v730
        %v732 = vpop.f32.mrf.mxu0
        %v733 = vadd.f32 0.0, %v732
        %734 = vmatmul.bf16.gmra.mxu0 %v586
        %v735 = vpop.f32.mrf.mxu0
        %v736 = vadd.f32 0.0, %v735
        %v737 = vpop.f32.mrf.mxu0
        %v738 = vadd.f32 0.0, %v737
        %739 = vmatmul.bf16.gmra.mxu0 %v589
        %v740 = vpop.f32.mrf.mxu0
        %v741 = vadd.f32 0.0, %v740
        %v742 = vpop.f32.mrf.mxu0
        %v743 = vadd.f32 0.0, %v742
        %744 = vmatmul.bf16.gmra.mxu0 %v592
        %v745 = vpop.f32.mrf.mxu0
        %v746 = vadd.f32 0.0, %v745
        %v747 = vpop.f32.mrf.mxu0
        %v748 = vadd.f32 0.0, %v747
        %749 = vmatmul.bf16.gmra.mxu0 %v595
        %v750 = vpop.f32.mrf.mxu0
        %v751 = vadd.f32 0.0, %v750
        %v752 = vpop.f32.mrf.mxu0
        %v753 = vadd.f32 0.0, %v752
        %754 = vmatmul.bf16.gmra.mxu0 %v598
        %v755 = vpop.f32.mrf.mxu0
        %v756 = vadd.f32 0.0, %v755
        %v757 = vpop.f32.mrf.mxu0
        %v758 = vadd.f32 0.0, %v757
        %759 = vmatmul.bf16.gmra.mxu0 %v601
        %v760 = vpop.f32.mrf.mxu0
        %v761 = vadd.f32 0.0, %v760
        %v762 = vpop.f32.mrf.mxu0
        %v763 = vadd.f32 0.0, %v762
        %764 = vmatmul.bf16.gmra.mxu0 %v604
        %v765 = vpop.f32.mrf.mxu0
        %v766 = vadd.f32 0.0, %v765
        %v767 = vpop.f32.mrf.mxu0
        %v768 = vadd.f32 0.0, %v767
        %769 = vmatmul.bf16.gmra.mxu0 %v607
        %v770 = vpop.f32.mrf.mxu0
        %v771 = vadd.f32 0.0, %v770
        %v772 = vpop.f32.mrf.mxu0
        %v773 = vadd.f32 0.0, %v772
        %774 = vmatmul.bf16.gmra.mxu0 %v610
        %v775 = vpop.f32.mrf.mxu0
        %v776 = vadd.f32 0.0, %v775
        %v777 = vpop.f32.mrf.mxu0
        %v778 = vadd.f32 0.0, %v777
        %779 = vmatmul.bf16.gmra.mxu0 %v613
        %v780 = vpop.f32.mrf.mxu0
        %v781 = vadd.f32 0.0, %v780
        %v782 = vpop.f32.mrf.mxu0
        %v783 = vadd.f32 0.0, %v782
        %784 = vmatmul.bf16.gmra.mxu0 %v616
        %v785 = vpop.f32.mrf.mxu0
        %v786 = vadd.f32 0.0, %v785
        %v787 = vpop.f32.mrf.mxu0
        %v788 = vadd.f32 0.0, %v787
        %789 = vmatmul.bf16.gmra.mxu0 %v619
        %v790 = vpop.f32.mrf.mxu0
        %v791 = vadd.f32 0.0, %v790
        %v792 = vpop.f32.mrf.mxu0
        %v793 = vadd.f32 0.0, %v792
        %794 = vmatmul.bf16.gmra.mxu0 %v622
        %v795 = vpop.f32.mrf.mxu0
        %v796 = vadd.f32 0.0, %v795
        %v797 = vpop.f32.mrf.mxu0
        %v798 = vadd.f32 0.0, %v797
        %799 = vmatmul.bf16.gmra.mxu0 %v625
        %v800 = vpop.f32.mrf.mxu0
        %v801 = vadd.f32 0.0, %v800
        %v802 = vpop.f32.mrf.mxu0
        %v803 = vadd.f32 0.0, %v802
        %804 = vdwg.mxu0
        %v805 = vmax.f32 %v637, %v726
        %806 = vmax.xlane.f32.xlu0 %v805
        %v807 = vpop.xlane.xlu0 %806
        %v808 = vmax.f32 %v639, %v728
        %809 = vmax.xlane.f32.xlu0 %v808
        %v810 = vpop.xlane.xlu0 %809
        %v811 = vmax.f32 %v642, %v731
        %812 = vmax.xlane.f32.xlu0 %v811
        %v813 = vpop.xlane.xlu0 %812
        %v814 = vmax.f32 %v644, %v733
        %815 = vmax.xlane.f32.xlu0 %v814
        %v816 = vpop.xlane.xlu0 %815
        %v817 = vmax.f32 %v647, %v736
        %818 = vmax.xlane.f32.xlu0 %v817
        %v819 = vpop.xlane.xlu0 %818
        %v820 = vmax.f32 %v649, %v738
        %821 = vmax.xlane.f32.xlu0 %v820
        %v822 = vpop.xlane.xlu0 %821
        %v823 = vmax.f32 %v652, %v741
        %824 = vmax.xlane.f32.xlu0 %v823
        %v825 = vpop.xlane.xlu0 %824
        %v826 = vmax.f32 %v654, %v743
        %827 = vmax.xlane.f32.xlu0 %v826
        %v828 = vpop.xlane.xlu0 %827
        %v829 = vmax.f32 %v657, %v746
        %830 = vmax.xlane.f32.xlu0 %v829
        %v831 = vpop.xlane.xlu0 %830
        %v832 = vmax.f32 %v659, %v748
        %833 = vmax.xlane.f32.xlu0 %v832
        %v834 = vpop.xlane.xlu0 %833
        %v835 = vmax.f32 %v662, %v751
        %836 = vmax.xlane.f32.xlu0 %v835
        %v837 = vpop.xlane.xlu0 %836
        %v838 = vmax.f32 %v664, %v753
        %839 = vmax.xlane.f32.xlu0 %v838
        %v840 = vpop.xlane.xlu0 %839
        %v841 = vmax.f32 %v667, %v756
        %842 = vmax.xlane.f32.xlu0 %v841
        %v843 = vpop.xlane.xlu0 %842
        %v844 = vmax.f32 %v669, %v758
        %845 = vmax.xlane.f32.xlu0 %v844
        %v846 = vpop.xlane.xlu0 %845
        %v847 = vmax.f32 %v672, %v761
        %848 = vmax.xlane.f32.xlu0 %v847
        %v849 = vpop.xlane.xlu0 %848
        %v850 = vmax.f32 %v674, %v763
        %851 = vmax.xlane.f32.xlu0 %v850
        %v852 = vpop.xlane.xlu0 %851
        %v853 = vmax.f32 %v677, %v766
        %854 = vmax.xlane.f32.xlu0 %v853
        %v855 = vpop.xlane.xlu0 %854
        %v856 = vmax.f32 %v679, %v768
        %857 = vmax.xlane.f32.xlu0 %v856
        %v858 = vpop.xlane.xlu0 %857
        %v859 = vmax.f32 %v682, %v771
        %860 = vmax.xlane.f32.xlu0 %v859
        %v861 = vpop.xlane.xlu0 %860
        %v862 = vmax.f32 %v684, %v773
        %863 = vmax.xlane.f32.xlu0 %v862
        %v864 = vpop.xlane.xlu0 %863
        %v865 = vmax.f32 %v687, %v776
        %866 = vmax.xlane.f32.xlu0 %v865
        %v867 = vpop.xlane.xlu0 %866
        %v868 = vmax.f32 %v689, %v778
        %869 = vmax.xlane.f32.xlu0 %v868
        %v870 = vpop.xlane.xlu0 %869
        %v871 = vmax.f32 %v692, %v781
        %872 = vmax.xlane.f32.xlu0 %v871
        %v873 = vpop.xlane.xlu0 %872
        %v874 = vmax.f32 %v694, %v783
        %875 = vmax.xlane.f32.xlu0 %v874
        %v876 = vpop.xlane.xlu0 %875
        %v877 = vmax.f32 %v697, %v786
        %878 = vmax.xlane.f32.xlu0 %v877
        %v879 = vpop.xlane.xlu0 %878
        %v880 = vmax.f32 %v699, %v788
        %881 = vmax.xlane.f32.xlu0 %v880
        %v882 = vpop.xlane.xlu0 %881
        %v883 = vmax.f32 %v702, %v791
        %884 = vmax.xlane.f32.xlu0 %v883
        %v885 = vpop.xlane.xlu0 %884
        %v886 = vmax.f32 %v704, %v793
        %887 = vmax.xlane.f32.xlu0 %v886
        %v888 = vpop.xlane.xlu0 %887
        %v889 = vmax.f32 %v707, %v796
        %890 = vmax.xlane.f32.xlu0 %v889
        %v891 = vpop.xlane.xlu0 %890
        %v892 = vmax.f32 %v709, %v798
        %893 = vmax.xlane.f32.xlu0 %v892
        %v894 = vpop.xlane.xlu0 %893
        %v895 = vmax.f32 %v712, %v801
        %896 = vmax.xlane.f32.xlu0 %v895
        %v897 = vpop.xlane.xlu0 %896
        %v898 = vmax.f32 %v714, %v803
        %899 = vmax.xlane.f32.xlu0 %v898
        %v900 = vpop.xlane.xlu0 %899
        %v901 = vsub.f32 %v637, %v807
        %v902 = vsub.f32 %v726, %v807
        %v903 = vsub.f32 %v639, %v810
        %v904 = vsub.f32 %v728, %v810
        %v905 = vsub.f32 %v642, %v813
        %v906 = vsub.f32 %v731, %v813
        %v907 = vsub.f32 %v644, %v816
        %v908 = vsub.f32 %v733, %v816
        %v909 = vsub.f32 %v647, %v819
        %v910 = vsub.f32 %v736, %v819
        %v911 = vsub.f32 %v649, %v822
        %v912 = vsub.f32 %v738, %v822
        %v913 = vsub.f32 %v652, %v825
        %v914 = vsub.f32 %v741, %v825
        %v915 = vsub.f32 %v654, %v828
        %v916 = vsub.f32 %v743, %v828
        %v917 = vsub.f32 %v657, %v831
        %v918 = vsub.f32 %v746, %v831
        %v919 = vsub.f32 %v659, %v834
        %v920 = vsub.f32 %v748, %v834
        %v921 = vsub.f32 %v662, %v837
        %v922 = vsub.f32 %v751, %v837
        %v923 = vsub.f32 %v664, %v840
        %v924 = vsub.f32 %v753, %v840
        %v925 = vsub.f32 %v667, %v843
        %v926 = vsub.f32 %v756, %v843
        %v927 = vsub.f32 %v669, %v846
        %v928 = vsub.f32 %v758, %v846
        %v929 = vsub.f32 %v672, %v849
        %v930 = vsub.f32 %v761, %v849
        %v931 = vsub.f32 %v674, %v852
        %v932 = vsub.f32 %v763, %v852
        %v933 = vsub.f32 %v677, %v855
        %v934 = vsub.f32 %v766, %v855
        %v935 = vsub.f32 %v679, %v858
        %v936 = vsub.f32 %v768, %v858
        %v937 = vsub.f32 %v682, %v861
        %v938 = vsub.f32 %v771, %v861
        %v939 = vsub.f32 %v684, %v864
        %v940 = vsub.f32 %v773, %v864
        %v941 = vsub.f32 %v687, %v867
        %v942 = vsub.f32 %v776, %v867
        %v943 = vsub.f32 %v689, %v870
        %v944 = vsub.f32 %v778, %v870
        %v945 = vsub.f32 %v692, %v873
        %v946 = vsub.f32 %v781, %v873
        %v947 = vsub.f32 %v694, %v876
        %v948 = vsub.f32 %v783, %v876
        %v949 = vsub.f32 %v697, %v879
        %v950 = vsub.f32 %v786, %v879
        %v951 = vsub.f32 %v699, %v882
        %v952 = vsub.f32 %v788, %v882
        %v953 = vsub.f32 %v702, %v885
        %v954 = vsub.f32 %v791, %v885
        %v955 = vsub.f32 %v704, %v888
        %v956 = vsub.f32 %v793, %v888
        %v957 = vsub.f32 %v707, %v891
        %v958 = vsub.f32 %v796, %v891
        %v959 = vsub.f32 %v709, %v894
        %v960 = vsub.f32 %v798, %v894
        %v961 = vsub.f32 %v712, %v897
        %v962 = vsub.f32 %v801, %v897
        %v963 = vsub.f32 %v714, %v900
        %v964 = vsub.f32 %v803, %v900
        %v965 = vmul.f32 %v901, 1.442695
        %v966 = vpow.pop %v965
        %v967 = vmul.f32 %v902, 1.442695
        %v968 = vpow.pop %v967
        %v969 = vmul.f32 %v903, 1.442695
        %v970 = vpow.pop %v969
        %v971 = vmul.f32 %v904, 1.442695
        %v972 = vpow.pop %v971
        %v973 = vmul.f32 %v905, 1.442695
        %v974 = vpow.pop %v973
        %v975 = vmul.f32 %v906, 1.442695
        %v976 = vpow.pop %v975
        %v977 = vmul.f32 %v907, 1.442695
        %v978 = vpow.pop %v977
        %v979 = vmul.f32 %v908, 1.442695
        %v980 = vpow.pop %v979
        %v981 = vmul.f32 %v909, 1.442695
        %v982 = vpow.pop %v981
        %v983 = vmul.f32 %v910, 1.442695
        %v984 = vpow.pop %v983
        %v985 = vmul.f32 %v911, 1.442695
        %v986 = vpow.pop %v985
        %v987 = vmul.f32 %v912, 1.442695
        %v988 = vpow.pop %v987
        %v989 = vmul.f32 %v913, 1.442695
        %v990 = vpow.pop %v989
        %v991 = vmul.f32 %v914, 1.442695
        %v992 = vpow.pop %v991
        %v993 = vmul.f32 %v915, 1.442695
        %v994 = vpow.pop %v993
        %v995 = vmul.f32 %v916, 1.442695
        %v996 = vpow.pop %v995
        %v997 = vmul.f32 %v917, 1.442695
        %v998 = vpow.pop %v997
        %v999 = vmul.f32 %v918, 1.442695
        %v1000 = vpow.pop %v999
        %v1001 = vmul.f32 %v919, 1.442695
        %v1002 = vpow.pop %v1001
        %v1003 = vmul.f32 %v920, 1.442695
        %v1004 = vpow.pop %v1003
        %v1005 = vmul.f32 %v921, 1.442695
        %v1006 = vpow.pop %v1005
        %v1007 = vmul.f32 %v922, 1.442695
        %v1008 = vpow.pop %v1007
        %v1009 = vmul.f32 %v923, 1.442695
        %v1010 = vpow.pop %v1009
        %v1011 = vmul.f32 %v924, 1.442695
        %v1012 = vpow.pop %v1011
        %v1013 = vmul.f32 %v925, 1.442695
        %v1014 = vpow.pop %v1013
        %v1015 = vmul.f32 %v926, 1.442695
        %v1016 = vpow.pop %v1015
        %v1017 = vmul.f32 %v927, 1.442695
        %v1018 = vpow.pop %v1017
        %v1019 = vmul.f32 %v928, 1.442695
        %v1020 = vpow.pop %v1019
        %v1021 = vmul.f32 %v929, 1.442695
        %v1022 = vpow.pop %v1021
        %v1023 = vmul.f32 %v930, 1.442695
        %v1024 = vpow.pop %v1023
        %v1025 = vmul.f32 %v931, 1.442695
        %v1026 = vpow.pop %v1025
        %v1027 = vmul.f32 %v932, 1.442695
        %v1028 = vpow.pop %v1027
        %v1029 = vmul.f32 %v933, 1.442695
        %v1030 = vpow.pop %v1029
        %v1031 = vmul.f32 %v934, 1.442695
        %v1032 = vpow.pop %v1031
        %v1033 = vmul.f32 %v935, 1.442695
        %v1034 = vpow.pop %v1033
        %v1035 = vmul.f32 %v936, 1.442695
        %v1036 = vpow.pop %v1035
        %v1037 = vmul.f32 %v937, 1.442695
        %v1038 = vpow.pop %v1037
        %v1039 = vmul.f32 %v938, 1.442695
        %v1040 = vpow.pop %v1039
        %v1041 = vmul.f32 %v939, 1.442695
        %v1042 = vpow.pop %v1041
        %v1043 = vmul.f32 %v940, 1.442695
        %v1044 = vpow.pop %v1043
        %v1045 = vmul.f32 %v941, 1.442695
        %v1046 = vpow.pop %v1045
        %v1047 = vmul.f32 %v942, 1.442695
        %v1048 = vpow.pop %v1047
        %v1049 = vmul.f32 %v943, 1.442695
        %v1050 = vpow.pop %v1049
        %v1051 = vmul.f32 %v944, 1.442695
        %v1052 = vpow.pop %v1051
        %v1053 = vmul.f32 %v945, 1.442695
        %v1054 = vpow.pop %v1053
        %v1055 = vmul.f32 %v946, 1.442695
        %v1056 = vpow.pop %v1055
        %v1057 = vmul.f32 %v947, 1.442695
        %v1058 = vpow.pop %v1057
        %v1059 = vmul.f32 %v948, 1.442695
        %v1060 = vpow.pop %v1059
        %v1061 = vmul.f32 %v949, 1.442695
        %v1062 = vpow.pop %v1061
        %v1063 = vmul.f32 %v950, 1.442695
        %v1064 = vpow.pop %v1063
        %v1065 = vmul.f32 %v951, 1.442695
        %v1066 = vpow.pop %v1065
        %v1067 = vmul.f32 %v952, 1.442695
        %v1068 = vpow.pop %v1067
        %v1069 = vmul.f32 %v953, 1.442695
        %v1070 = vpow.pop %v1069
        %v1071 = vmul.f32 %v954, 1.442695
        %v1072 = vpow.pop %v1071
        %v1073 = vmul.f32 %v955, 1.442695
        %v1074 = vpow.pop %v1073
        %v1075 = vmul.f32 %v956, 1.442695
        %v1076 = vpow.pop %v1075
        %v1077 = vmul.f32 %v957, 1.442695
        %v1078 = vpow.pop %v1077
        %v1079 = vmul.f32 %v958, 1.442695
        %v1080 = vpow.pop %v1079
        %v1081 = vmul.f32 %v959, 1.442695
        %v1082 = vpow.pop %v1081
        %v1083 = vmul.f32 %v960, 1.442695
        %v1084 = vpow.pop %v1083
        %v1085 = vmul.f32 %v961, 1.442695
        %v1086 = vpow.pop %v1085
        %v1087 = vmul.f32 %v962, 1.442695
        %v1088 = vpow.pop %v1087
        %v1089 = vmul.f32 %v963, 1.442695
        %v1090 = vpow.pop %v1089
        %v1091 = vmul.f32 %v964, 1.442695
        %v1092 = vpow.pop %v1091
        %v1093 = vadd.f32 %v966, %v968
        %1094 = vadd.xlane.f32.xlu0 %v1093
        %v1095 = vpop.xlane.xlu0 %1094
        %v1096 = vadd.f32 %v970, %v972
        %1097 = vadd.xlane.f32.xlu0 %v1096
        %v1098 = vpop.xlane.xlu0 %1097
        %v1099 = vadd.f32 %v974, %v976
        %1100 = vadd.xlane.f32.xlu0 %v1099
        %v1101 = vpop.xlane.xlu0 %1100
        %v1102 = vadd.f32 %v978, %v980
        %1103 = vadd.xlane.f32.xlu0 %v1102
        %v1104 = vpop.xlane.xlu0 %1103
        %v1105 = vadd.f32 %v982, %v984
        %1106 = vadd.xlane.f32.xlu0 %v1105
        %v1107 = vpop.xlane.xlu0 %1106
        %v1108 = vadd.f32 %v986, %v988
        %1109 = vadd.xlane.f32.xlu0 %v1108
        %v1110 = vpop.xlane.xlu0 %1109
        %v1111 = vadd.f32 %v990, %v992
        %1112 = vadd.xlane.f32.xlu0 %v1111
        %v1113 = vpop.xlane.xlu0 %1112
        %v1114 = vadd.f32 %v994, %v996
        %1115 = vadd.xlane.f32.xlu0 %v1114
        %v1116 = vpop.xlane.xlu0 %1115
        %v1117 = vadd.f32 %v998, %v1000
        %1118 = vadd.xlane.f32.xlu0 %v1117
        %v1119 = vpop.xlane.xlu0 %1118
        %v1120 = vadd.f32 %v1002, %v1004
        %1121 = vadd.xlane.f32.xlu0 %v1120
        %v1122 = vpop.xlane.xlu0 %1121
        %v1123 = vadd.f32 %v1006, %v1008
        %1124 = vadd.xlane.f32.xlu0 %v1123
        %v1125 = vpop.xlane.xlu0 %1124
        %v1126 = vadd.f32 %v1010, %v1012
        %1127 = vadd.xlane.f32.xlu0 %v1126
        %v1128 = vpop.xlane.xlu0 %1127
        %v1129 = vadd.f32 %v1014, %v1016
        %1130 = vadd.xlane.f32.xlu0 %v1129
        %v1131 = vpop.xlane.xlu0 %1130
        %v1132 = vadd.f32 %v1018, %v1020
        %1133 = vadd.xlane.f32.xlu0 %v1132
        %v1134 = vpop.xlane.xlu0 %1133
        %v1135 = vadd.f32 %v1022, %v1024
        %1136 = vadd.xlane.f32.xlu0 %v1135
        %v1137 = vpop.xlane.xlu0 %1136
        %v1138 = vadd.f32 %v1026, %v1028
        %1139 = vadd.xlane.f32.xlu0 %v1138
        %v1140 = vpop.xlane.xlu0 %1139
        %v1141 = vadd.f32 %v1030, %v1032
        %1142 = vadd.xlane.f32.xlu0 %v1141
        %v1143 = vpop.xlane.xlu0 %1142
        %v1144 = vadd.f32 %v1034, %v1036
        %1145 = vadd.xlane.f32.xlu0 %v1144
        %v1146 = vpop.xlane.xlu0 %1145
        %v1147 = vadd.f32 %v1038, %v1040
        %1148 = vadd.xlane.f32.xlu0 %v1147
        %v1149 = vpop.xlane.xlu0 %1148
        %v1150 = vadd.f32 %v1042, %v1044
        %1151 = vadd.xlane.f32.xlu0 %v1150
        %v1152 = vpop.xlane.xlu0 %1151
        %v1153 = vadd.f32 %v1046, %v1048
        %1154 = vadd.xlane.f32.xlu0 %v1153
        %v1155 = vpop.xlane.xlu0 %1154
        %v1156 = vadd.f32 %v1050, %v1052
        %1157 = vadd.xlane.f32.xlu0 %v1156
        %v1158 = vpop.xlane.xlu0 %1157
        %v1159 = vadd.f32 %v1054, %v1056
        %1160 = vadd.xlane.f32.xlu0 %v1159
        %v1161 = vpop.xlane.xlu0 %1160
        %v1162 = vadd.f32 %v1058, %v1060
        %1163 = vadd.xlane.f32.xlu0 %v1162
        %v1164 = vpop.xlane.xlu0 %1163
        %v1165 = vadd.f32 %v1062, %v1064
        %1166 = vadd.xlane.f32.xlu0 %v1165
        %v1167 = vpop.xlane.xlu0 %1166
        %v1168 = vadd.f32 %v1066, %v1068
        %1169 = vadd.xlane.f32.xlu0 %v1168
        %v1170 = vpop.xlane.xlu0 %1169
        %v1171 = vadd.f32 %v1070, %v1072
        %1172 = vadd.xlane.f32.xlu0 %v1171
        %v1173 = vpop.xlane.xlu0 %1172
        %v1174 = vadd.f32 %v1074, %v1076
        %1175 = vadd.xlane.f32.xlu0 %v1174
        %v1176 = vpop.xlane.xlu0 %1175
        %v1177 = vadd.f32 %v1078, %v1080
        %1178 = vadd.xlane.f32.xlu0 %v1177
        %v1179 = vpop.xlane.xlu0 %1178
        %v1180 = vadd.f32 %v1082, %v1084
        %1181 = vadd.xlane.f32.xlu0 %v1180
        %v1182 = vpop.xlane.xlu0 %1181
        %v1183 = vadd.f32 %v1086, %v1088
        %1184 = vadd.xlane.f32.xlu0 %v1183
        %v1185 = vpop.xlane.xlu0 %1184
        %v1186 = vadd.f32 %v1090, %v1092
        %1187 = vadd.xlane.f32.xlu0 %v1186
        %v1188 = vpop.xlane.xlu0 %1187
        %v1190 = vperm.slane %v317, 0
        %v1196 = vunpack.c.l.b16 %v312
        %v1197 = vunpack.c.l.b16 %v313
        %v1198 = vunpack.c.l.b16 %v314
        %v1199 = vunpack.c.l.b16 %v315
        %v1200 = vpack.c.b16 %v1197, %v1196
        %v1201 = vpack.c.b16 %v1199, %v1198
        %1204 = vmatpush.bf16.msra.mxu0 0
        %1205 = vmatpush.bf16.msra.mxu0 0
        %1206 = vmatpush.bf16.msra.mxu0 0
        %1207 = vmatpush.bf16.msra.mxu0 0
        %1208 = vmatpush.bf16.msra.mxu0 0
        %1209 = vmatpush.bf16.msra.mxu0 0
        %1210 = vmatpush.bf16.msra.mxu0 %v1201
        %1211 = vmatpush.bf16.msra.mxu0 %v1200
        %1212 = vmatmul.bf16.gmra.mxu0 %v427
        %v1213 = vpop.f32.mrf.mxu0
        %v1214 = vadd.f32 %v1190, %v1213
        %v1215 = vpop.f32.mrf.mxu0
        %v1216 = vadd.f32 %v1190, %v1215
        %1217 = vmatmul.bf16.gmra.mxu0 %v430
        %v1218 = vpop.f32.mrf.mxu0
        %v1219 = vadd.f32 %v1190, %v1218
        %v1220 = vpop.f32.mrf.mxu0
        %v1221 = vadd.f32 %v1190, %v1220
        %1222 = vmatmul.bf16.gmra.mxu0 %v433
        %v1223 = vpop.f32.mrf.mxu0
        %v1224 = vadd.f32 %v1190, %v1223
        %v1225 = vpop.f32.mrf.mxu0
        %v1226 = vadd.f32 %v1190, %v1225
        %1227 = vmatmul.bf16.gmra.mxu0 %v436
        %v1228 = vpop.f32.mrf.mxu0
        %v1229 = vadd.f32 %v1190, %v1228
        %v1230 = vpop.f32.mrf.mxu0
        %v1231 = vadd.f32 %v1190, %v1230
        %1232 = vmatmul.bf16.gmra.mxu0 %v439
        %v1233 = vpop.f32.mrf.mxu0
        %v1234 = vadd.f32 %v1190, %v1233
        %v1235 = vpop.f32.mrf.mxu0
        %v1236 = vadd.f32 %v1190, %v1235
        %1237 = vmatmul.bf16.gmra.mxu0 %v442
        %v1238 = vpop.f32.mrf.mxu0
        %v1239 = vadd.f32 %v1190, %v1238
        %v1240 = vpop.f32.mrf.mxu0
        %v1241 = vadd.f32 %v1190, %v1240
        %1242 = vmatmul.bf16.gmra.mxu0 %v445
        %v1243 = vpop.f32.mrf.mxu0
        %v1244 = vadd.f32 %v1190, %v1243
        %v1245 = vpop.f32.mrf.mxu0
        %v1246 = vadd.f32 %v1190, %v1245
        %1247 = vmatmul.bf16.gmra.mxu0 %v448
        %v1248 = vpop.f32.mrf.mxu0
        %v1249 = vadd.f32 %v1190, %v1248
        %v1250 = vpop.f32.mrf.mxu0
        %v1251 = vadd.f32 %v1190, %v1250
        %1252 = vmatmul.bf16.gmra.mxu0 %v451
        %v1253 = vpop.f32.mrf.mxu0
        %v1254 = vadd.f32 %v1190, %v1253
        %v1255 = vpop.f32.mrf.mxu0
        %v1256 = vadd.f32 %v1190, %v1255
        %1257 = vmatmul.bf16.gmra.mxu0 %v454
        %v1258 = vpop.f32.mrf.mxu0
        %v1259 = vadd.f32 %v1190, %v1258
        %v1260 = vpop.f32.mrf.mxu0
        %v1261 = vadd.f32 %v1190, %v1260
        %1262 = vmatmul.bf16.gmra.mxu0 %v457
        %v1263 = vpop.f32.mrf.mxu0
        %v1264 = vadd.f32 %v1190, %v1263
        %v1265 = vpop.f32.mrf.mxu0
        %v1266 = vadd.f32 %v1190, %v1265
        %1267 = vmatmul.bf16.gmra.mxu0 %v460
        %v1268 = vpop.f32.mrf.mxu0
        %v1269 = vadd.f32 %v1190, %v1268
        %v1270 = vpop.f32.mrf.mxu0
        %v1271 = vadd.f32 %v1190, %v1270
        %1272 = vmatmul.bf16.gmra.mxu0 %v463
        %v1273 = vpop.f32.mrf.mxu0
        %v1274 = vadd.f32 %v1190, %v1273
        %v1275 = vpop.f32.mrf.mxu0
        %v1276 = vadd.f32 %v1190, %v1275
        %1277 = vmatmul.bf16.gmra.mxu0 %v466
        %v1278 = vpop.f32.mrf.mxu0
        %v1279 = vadd.f32 %v1190, %v1278
        %v1280 = vpop.f32.mrf.mxu0
        %v1281 = vadd.f32 %v1190, %v1280
        %1282 = vmatmul.bf16.gmra.mxu0 %v469
        %v1283 = vpop.f32.mrf.mxu0
        %v1284 = vadd.f32 %v1190, %v1283
        %v1285 = vpop.f32.mrf.mxu0
        %v1286 = vadd.f32 %v1190, %v1285
        %1287 = vmatmul.bf16.gmra.mxu0 %v472
        %v1288 = vpop.f32.mrf.mxu0
        %v1289 = vadd.f32 %v1190, %v1288
        %v1290 = vpop.f32.mrf.mxu0
        %v1291 = vadd.f32 %v1190, %v1290
        %1292 = vdwg.mxu0
        %v1293 = vpack.c.bf16 %v970, %v966
        %v1294 = vpack.c.bf16 %v972, %v968
        %v1295 = vpack.c.bf16 %v978, %v974
        %v1296 = vpack.c.bf16 %v980, %v976
        %v1297 = vpack.c.bf16 %v986, %v982
        %v1298 = vpack.c.bf16 %v988, %v984
        %v1299 = vpack.c.bf16 %v994, %v990
        %v1300 = vpack.c.bf16 %v996, %v992
        %v1301 = vpack.c.bf16 %v1002, %v998
        %v1302 = vpack.c.bf16 %v1004, %v1000
        %v1303 = vpack.c.bf16 %v1010, %v1006
        %v1304 = vpack.c.bf16 %v1012, %v1008
        %v1305 = vpack.c.bf16 %v1018, %v1014
        %v1306 = vpack.c.bf16 %v1020, %v1016
        %v1307 = vpack.c.bf16 %v1026, %v1022
        %v1308 = vpack.c.bf16 %v1028, %v1024
        %v1309 = vpack.c.bf16 %v1034, %v1030
        %v1310 = vpack.c.bf16 %v1036, %v1032
        %v1311 = vpack.c.bf16 %v1042, %v1038
        %v1312 = vpack.c.bf16 %v1044, %v1040
        %v1313 = vpack.c.bf16 %v1050, %v1046
        %v1314 = vpack.c.bf16 %v1052, %v1048
        %v1315 = vpack.c.bf16 %v1058, %v1054
        %v1316 = vpack.c.bf16 %v1060, %v1056
        %v1317 = vpack.c.bf16 %v1066, %v1062
        %v1318 = vpack.c.bf16 %v1068, %v1064
        %v1319 = vpack.c.bf16 %v1074, %v1070
        %v1320 = vpack.c.bf16 %v1076, %v1072
        %v1321 = vpack.c.bf16 %v1082, %v1078
        %v1322 = vpack.c.bf16 %v1084, %v1080
        %v1323 = vpack.c.bf16 %v1090, %v1086
        %v1324 = vpack.c.bf16 %v1092, %v1088
        %v1325 = vpack.c.bf16 %v1216, %v1214
        %v1326 = vpack.c.bf16 %v1221, %v1219
        %v1327 = vpack.c.bf16 %v1226, %v1224
        %v1328 = vpack.c.bf16 %v1231, %v1229
        %v1329 = vpack.c.bf16 %v1236, %v1234
        %v1330 = vpack.c.bf16 %v1241, %v1239
        %v1331 = vpack.c.bf16 %v1246, %v1244
        %v1332 = vpack.c.bf16 %v1251, %v1249
        %v1333 = vpack.c.bf16 %v1256, %v1254
        %v1334 = vpack.c.bf16 %v1261, %v1259
        %v1335 = vpack.c.bf16 %v1266, %v1264
        %v1336 = vpack.c.bf16 %v1271, %v1269
        %v1337 = vpack.c.bf16 %v1276, %v1274
        %v1338 = vpack.c.bf16 %v1281, %v1279
        %v1339 = vpack.c.bf16 %v1286, %v1284
        %v1340 = vpack.c.bf16 %v1291, %v1289
        %1341 = vmatpush.bf16.msra.mxu0 %v1332
        %1342 = vmatpush.bf16.msra.mxu0 %v1331
        %1343 = vmatpush.bf16.msra.mxu0 %v1330
        %1344 = vmatpush.bf16.msra.mxu0 %v1329
        %1345 = vmatpush.bf16.msra.mxu0 %v1328
        %1346 = vmatpush.bf16.msra.mxu0 %v1327
        %1347 = vmatpush.bf16.msra.mxu0 %v1326
        %1348 = vmatpush.bf16.msra.mxu0 %v1325
        %1349 = vmatmul.bf16.gmra.mxu0 %v1293
        %v1350 = vpop.f32.mrf.mxu0
        %v1351 = vadd.f32 0.0, %v1350
        %v1352 = vpop.f32.mrf.mxu0
        %v1353 = vadd.f32 0.0, %v1352
        %1354 = vmatmul.bf16.gmra.mxu0 %v1295
        %v1355 = vpop.f32.mrf.mxu0
        %v1356 = vadd.f32 0.0, %v1355
        %v1357 = vpop.f32.mrf.mxu0
        %v1358 = vadd.f32 0.0, %v1357
        %1359 = vmatmul.bf16.gmra.mxu0 %v1297
        %v1360 = vpop.f32.mrf.mxu0
        %v1361 = vadd.f32 0.0, %v1360
        %v1362 = vpop.f32.mrf.mxu0
        %v1363 = vadd.f32 0.0, %v1362
        %1364 = vmatmul.bf16.gmra.mxu0 %v1299
        %v1365 = vpop.f32.mrf.mxu0
        %v1366 = vadd.f32 0.0, %v1365
        %v1367 = vpop.f32.mrf.mxu0
        %v1368 = vadd.f32 0.0, %v1367
        %1369 = vmatmul.bf16.gmra.mxu0 %v1301
        %v1370 = vpop.f32.mrf.mxu0
        %v1371 = vadd.f32 0.0, %v1370
        %v1372 = vpop.f32.mrf.mxu0
        %v1373 = vadd.f32 0.0, %v1372
        %1374 = vmatmul.bf16.gmra.mxu0 %v1303
        %v1375 = vpop.f32.mrf.mxu0
        %v1376 = vadd.f32 0.0, %v1375
        %v1377 = vpop.f32.mrf.mxu0
        %v1378 = vadd.f32 0.0, %v1377
        %1379 = vmatmul.bf16.gmra.mxu0 %v1305
        %v1380 = vpop.f32.mrf.mxu0
        %v1381 = vadd.f32 0.0, %v1380
        %v1382 = vpop.f32.mrf.mxu0
        %v1383 = vadd.f32 0.0, %v1382
        %1384 = vmatmul.bf16.gmra.mxu0 %v1307
        %v1385 = vpop.f32.mrf.mxu0
        %v1386 = vadd.f32 0.0, %v1385
        %v1387 = vpop.f32.mrf.mxu0
        %v1388 = vadd.f32 0.0, %v1387
        %1389 = vmatmul.bf16.gmra.mxu0 %v1309
        %v1390 = vpop.f32.mrf.mxu0
        %v1391 = vadd.f32 0.0, %v1390
        %v1392 = vpop.f32.mrf.mxu0
        %v1393 = vadd.f32 0.0, %v1392
        %1394 = vmatmul.bf16.gmra.mxu0 %v1311
        %v1395 = vpop.f32.mrf.mxu0
        %v1396 = vadd.f32 0.0, %v1395
        %v1397 = vpop.f32.mrf.mxu0
        %v1398 = vadd.f32 0.0, %v1397
        %1399 = vmatmul.bf16.gmra.mxu0 %v1313
        %v1400 = vpop.f32.mrf.mxu0
        %v1401 = vadd.f32 0.0, %v1400
        %v1402 = vpop.f32.mrf.mxu0
        %v1403 = vadd.f32 0.0, %v1402
        %1404 = vmatmul.bf16.gmra.mxu0 %v1315
        %v1405 = vpop.f32.mrf.mxu0
        %v1406 = vadd.f32 0.0, %v1405
        %v1407 = vpop.f32.mrf.mxu0
        %v1408 = vadd.f32 0.0, %v1407
        %1409 = vmatmul.bf16.gmra.mxu0 %v1317
        %v1410 = vpop.f32.mrf.mxu0
        %v1411 = vadd.f32 0.0, %v1410
        %v1412 = vpop.f32.mrf.mxu0
        %v1413 = vadd.f32 0.0, %v1412
        %1414 = vmatmul.bf16.gmra.mxu0 %v1319
        %v1415 = vpop.f32.mrf.mxu0
        %v1416 = vadd.f32 0.0, %v1415
        %v1417 = vpop.f32.mrf.mxu0
        %v1418 = vadd.f32 0.0, %v1417
        %1419 = vmatmul.bf16.gmra.mxu0 %v1321
        %v1420 = vpop.f32.mrf.mxu0
        %v1421 = vadd.f32 0.0, %v1420
        %v1422 = vpop.f32.mrf.mxu0
        %v1423 = vadd.f32 0.0, %v1422
        %1424 = vmatmul.bf16.gmra.mxu0 %v1323
        %v1425 = vpop.f32.mrf.mxu0
        %v1426 = vadd.f32 0.0, %v1425
        %v1427 = vpop.f32.mrf.mxu0
        %v1428 = vadd.f32 0.0, %v1427
        %1429 = vdwg.mxu0
        %1430 = vmatpush.bf16.msra.mxu0 %v1340
        %1431 = vmatpush.bf16.msra.mxu0 %v1339
        %1432 = vmatpush.bf16.msra.mxu0 %v1338
        %1433 = vmatpush.bf16.msra.mxu0 %v1337
        %1434 = vmatpush.bf16.msra.mxu0 %v1336
        %1435 = vmatpush.bf16.msra.mxu0 %v1335
        %1436 = vmatpush.bf16.msra.mxu0 %v1334
        %1437 = vmatpush.bf16.msra.mxu0 %v1333
        %1438 = vmatmul.bf16.gmra.mxu0 %v1294
        %v1439 = vpop.f32.mrf.mxu0
        %v1440 = vadd.f32 %v1351, %v1439
        %v1441 = vpop.f32.mrf.mxu0
        %v1442 = vadd.f32 %v1353, %v1441
        %1443 = vmatmul.bf16.gmra.mxu0 %v1296
        %v1444 = vpop.f32.mrf.mxu0
        %v1445 = vadd.f32 %v1356, %v1444
        %v1446 = vpop.f32.mrf.mxu0
        %v1447 = vadd.f32 %v1358, %v1446
        %1448 = vmatmul.bf16.gmra.mxu0 %v1298
        %v1449 = vpop.f32.mrf.mxu0
        %v1450 = vadd.f32 %v1361, %v1449
        %v1451 = vpop.f32.mrf.mxu0
        %v1452 = vadd.f32 %v1363, %v1451
        %1453 = vmatmul.bf16.gmra.mxu0 %v1300
        %v1454 = vpop.f32.mrf.mxu0
        %v1455 = vadd.f32 %v1366, %v1454
        %v1456 = vpop.f32.mrf.mxu0
        %v1457 = vadd.f32 %v1368, %v1456
        %1458 = vmatmul.bf16.gmra.mxu0 %v1302
        %v1459 = vpop.f32.mrf.mxu0
        %v1460 = vadd.f32 %v1371, %v1459
        %v1461 = vpop.f32.mrf.mxu0
        %v1462 = vadd.f32 %v1373, %v1461
        %1463 = vmatmul.bf16.gmra.mxu0 %v1304
        %v1464 = vpop.f32.mrf.mxu0
        %v1465 = vadd.f32 %v1376, %v1464
        %v1466 = vpop.f32.mrf.mxu0
        %v1467 = vadd.f32 %v1378, %v1466
        %1468 = vmatmul.bf16.gmra.mxu0 %v1306
        %v1469 = vpop.f32.mrf.mxu0
        %v1470 = vadd.f32 %v1381, %v1469
        %v1471 = vpop.f32.mrf.mxu0
        %v1472 = vadd.f32 %v1383, %v1471
        %1473 = vmatmul.bf16.gmra.mxu0 %v1308
        %v1474 = vpop.f32.mrf.mxu0
        %v1475 = vadd.f32 %v1386, %v1474
        %v1476 = vpop.f32.mrf.mxu0
        %v1477 = vadd.f32 %v1388, %v1476
        %1478 = vmatmul.bf16.gmra.mxu0 %v1310
        %v1479 = vpop.f32.mrf.mxu0
        %v1480 = vadd.f32 %v1391, %v1479
        %v1481 = vpop.f32.mrf.mxu0
        %v1482 = vadd.f32 %v1393, %v1481
        %1483 = vmatmul.bf16.gmra.mxu0 %v1312
        %v1484 = vpop.f32.mrf.mxu0
        %v1485 = vadd.f32 %v1396, %v1484
        %v1486 = vpop.f32.mrf.mxu0
        %v1487 = vadd.f32 %v1398, %v1486
        %1488 = vmatmul.bf16.gmra.mxu0 %v1314
        %v1489 = vpop.f32.mrf.mxu0
        %v1490 = vadd.f32 %v1401, %v1489
        %v1491 = vpop.f32.mrf.mxu0
        %v1492 = vadd.f32 %v1403, %v1491
        %1493 = vmatmul.bf16.gmra.mxu0 %v1316
        %v1494 = vpop.f32.mrf.mxu0
        %v1495 = vadd.f32 %v1406, %v1494
        %v1496 = vpop.f32.mrf.mxu0
        %v1497 = vadd.f32 %v1408, %v1496
        %1498 = vmatmul.bf16.gmra.mxu0 %v1318
        %v1499 = vpop.f32.mrf.mxu0
        %v1500 = vadd.f32 %v1411, %v1499
        %v1501 = vpop.f32.mrf.mxu0
        %v1502 = vadd.f32 %v1413, %v1501
        %1503 = vmatmul.bf16.gmra.mxu0 %v1320
        %v1504 = vpop.f32.mrf.mxu0
        %v1505 = vadd.f32 %v1416, %v1504
        %v1506 = vpop.f32.mrf.mxu0
        %v1507 = vadd.f32 %v1418, %v1506
        %1508 = vmatmul.bf16.gmra.mxu0 %v1322
        %v1509 = vpop.f32.mrf.mxu0
        %v1510 = vadd.f32 %v1421, %v1509
        %v1511 = vpop.f32.mrf.mxu0
        %v1512 = vadd.f32 %v1423, %v1511
        %1513 = vmatmul.bf16.gmra.mxu0 %v1324
        %v1514 = vpop.f32.mrf.mxu0
        %v1515 = vadd.f32 %v1426, %v1514
        %v1516 = vpop.f32.mrf.mxu0
        %v1517 = vadd.f32 %v1428, %v1516
        %1518 = vdwg.mxu0
        %v1519 = vrcp.pop %v1095
        %v1520 = vrcp.pop %v1098
        %v1521 = vrcp.pop %v1101
        %v1522 = vrcp.pop %v1104
        %v1523 = vrcp.pop %v1107
        %v1524 = vrcp.pop %v1110
        %v1525 = vrcp.pop %v1113
        %v1526 = vrcp.pop %v1116
        %v1527 = vrcp.pop %v1119
        %v1528 = vrcp.pop %v1122
        %v1529 = vrcp.pop %v1125
        %v1530 = vrcp.pop %v1128
        %v1531 = vrcp.pop %v1131
        %v1532 = vrcp.pop %v1134
        %v1533 = vrcp.pop %v1137
        %v1534 = vrcp.pop %v1140
        %v1535 = vrcp.pop %v1143
        %v1536 = vrcp.pop %v1146
        %v1537 = vrcp.pop %v1149
        %v1538 = vrcp.pop %v1152
        %v1539 = vrcp.pop %v1155
        %v1540 = vrcp.pop %v1158
        %v1541 = vrcp.pop %v1161
        %v1542 = vrcp.pop %v1164
        %v1543 = vrcp.pop %v1167
        %v1544 = vrcp.pop %v1170
        %v1545 = vrcp.pop %v1173
        %v1546 = vrcp.pop %v1176
        %v1547 = vrcp.pop %v1179
        %v1548 = vrcp.pop %v1182
        %v1549 = vrcp.pop %v1185
        %v1550 = vrcp.pop %v1188
        %v1551 = vstv %s307
        %v1552 = vmul.f32 %v1551, %v1519
        %v1553 = vmul.f32 %v1551, %v1520
        %v1554 = vmul.f32 %v1551, %v1521
        %v1555 = vmul.f32 %v1551, %v1522
        %v1556 = vmul.f32 %v1551, %v1523
        %v1557 = vmul.f32 %v1551, %v1524
        %v1558 = vmul.f32 %v1551, %v1525
        %v1559 = vmul.f32 %v1551, %v1526
        %v1560 = vmul.f32 %v1551, %v1527
        %v1561 = vmul.f32 %v1551, %v1528
        %v1562 = vmul.f32 %v1551, %v1529
        %v1563 = vmul.f32 %v1551, %v1530
        %v1564 = vmul.f32 %v1551, %v1531
        %v1565 = vmul.f32 %v1551, %v1532
        %v1566 = vmul.f32 %v1551, %v1533
        %v1567 = vmul.f32 %v1551, %v1534
        %v1568 = vmul.f32 %v1551, %v1535
        %v1569 = vmul.f32 %v1551, %v1536
        %v1570 = vmul.f32 %v1551, %v1537
        %v1571 = vmul.f32 %v1551, %v1538
        %v1572 = vmul.f32 %v1551, %v1539
        %v1573 = vmul.f32 %v1551, %v1540
        %v1574 = vmul.f32 %v1551, %v1541
        %v1575 = vmul.f32 %v1551, %v1542
        %v1576 = vmul.f32 %v1551, %v1543
        %v1577 = vmul.f32 %v1551, %v1544
        %v1578 = vmul.f32 %v1551, %v1545
        %v1579 = vmul.f32 %v1551, %v1546
        %v1580 = vmul.f32 %v1551, %v1547
        %v1581 = vmul.f32 %v1551, %v1548
        %v1582 = vmul.f32 %v1551, %v1549
        %v1583 = vmul.f32 %v1551, %v1550
        %v1584 = vmul.f32 %v1440, %v1552
        %v1585 = vmul.f32 %v1442, %v1553
        %v1586 = vmul.f32 %v1445, %v1554
        %v1587 = vmul.f32 %v1447, %v1555
        %v1588 = vmul.f32 %v1450, %v1556
        %v1589 = vmul.f32 %v1452, %v1557
        %v1590 = vmul.f32 %v1455, %v1558
        %v1591 = vmul.f32 %v1457, %v1559
        %v1592 = vmul.f32 %v1460, %v1560
        %v1593 = vmul.f32 %v1462, %v1561
        %v1594 = vmul.f32 %v1465, %v1562
        %v1595 = vmul.f32 %v1467, %v1563
        %v1596 = vmul.f32 %v1470, %v1564
        %v1597 = vmul.f32 %v1472, %v1565
        %v1598 = vmul.f32 %v1475, %v1566
        %v1599 = vmul.f32 %v1477, %v1567
        %v1600 = vmul.f32 %v1480, %v1568
        %v1601 = vmul.f32 %v1482, %v1569
        %v1602 = vmul.f32 %v1485, %v1570
        %v1603 = vmul.f32 %v1487, %v1571
        %v1604 = vmul.f32 %v1490, %v1572
        %v1605 = vmul.f32 %v1492, %v1573
        %v1606 = vmul.f32 %v1495, %v1574
        %v1607 = vmul.f32 %v1497, %v1575
        %v1608 = vmul.f32 %v1500, %v1576
        %v1609 = vmul.f32 %v1502, %v1577
        %v1610 = vmul.f32 %v1505, %v1578
        %v1611 = vmul.f32 %v1507, %v1579
        %v1612 = vmul.f32 %v1510, %v1580
        %v1613 = vmul.f32 %v1512, %v1581
        %v1614 = vmul.f32 %v1515, %v1582
        %v1615 = vmul.f32 %v1517, %v1583
        %1616 = vxpose.xlu0.b32.start [1/16] %v1584, 128
        %1617 = vxpose.xlu0.b32.cont [2/16] %v1585, 128
        %1618 = vxpose.xlu0.b32.cont [3/16] %v1586, 128
        %1619 = vxpose.xlu0.b32.cont [4/16] %v1587, 128
        %1620 = vxpose.xlu0.b32.cont [5/16] %v1588, 128
        %1621 = vxpose.xlu0.b32.cont [6/16] %v1589, 128
        %1622 = vxpose.xlu0.b32.cont [7/16] %v1590, 128
        %1623 = vxpose.xlu0.b32.cont [8/16] %v1591, 128
        %1624 = vxpose.xlu0.b32.cont [9/16] %v1592, 128
        %1625 = vxpose.xlu0.b32.cont [10/16] %v1593, 128
        %1626 = vxpose.xlu0.b32.cont [11/16] %v1594, 128
        %1627 = vxpose.xlu0.b32.cont [12/16] %v1595, 128
        %1628 = vxpose.xlu0.b32.cont [13/16] %v1596, 128
        %1629 = vxpose.xlu0.b32.cont [14/16] %v1597, 128
        %1630 = vxpose.xlu0.b32.cont [15/16] %v1598, 128
        %1631 = vxpose.xlu0.b32.end [16/16] %v1599, 128
        %v1632 = vpop.trf.xlu0
        %v1633 = vpop.trf.xlu0
        %v1634 = vpop.trf.xlu0
        %v1635 = vpop.trf.xlu0
        %v1636 = vpop.trf.xlu0
        %v1637 = vpop.trf.xlu0
        %v1638 = vpop.trf.xlu0
        %v1639 = vpop.trf.xlu0
        %v1640 = vpop.trf.xlu0
        %v1641 = vpop.trf.xlu0
        %v1642 = vpop.trf.xlu0
        %v1643 = vpop.trf.xlu0
        %v1644 = vpop.trf.xlu0
        %v1645 = vpop.trf.xlu0
        %v1646 = vpop.trf.xlu0
        %v1647 = vpop.trf.xlu0
        %1648 = vxpose.xlu0.b32.start [1/16] %v1600, 128
        %1649 = vxpose.xlu0.b32.cont [2/16] %v1601, 128
        %1650 = vxpose.xlu0.b32.cont [3/16] %v1602, 128
        %1651 = vxpose.xlu0.b32.cont [4/16] %v1603, 128
        %1652 = vxpose.xlu0.b32.cont [5/16] %v1604, 128
        %1653 = vxpose.xlu0.b32.cont [6/16] %v1605, 128
        %1654 = vxpose.xlu0.b32.cont [7/16] %v1606, 128
        %1655 = vxpose.xlu0.b32.cont [8/16] %v1607, 128
        %1656 = vxpose.xlu0.b32.cont [9/16] %v1608, 128
        %1657 = vxpose.xlu0.b32.cont [10/16] %v1609, 128
        %1658 = vxpose.xlu0.b32.cont [11/16] %v1610, 128
        %1659 = vxpose.xlu0.b32.cont [12/16] %v1611, 128
        %1660 = vxpose.xlu0.b32.cont [13/16] %v1612, 128
        %1661 = vxpose.xlu0.b32.cont [14/16] %v1613, 128
        %1662 = vxpose.xlu0.b32.cont [15/16] %v1614, 128
        %1663 = vxpose.xlu0.b32.end [16/16] %v1615, 128
        %v1664 = vpop.trf.xlu0
        %v1665 = vpop.trf.xlu0
        %v1666 = vpop.trf.xlu0
        %v1667 = vpop.trf.xlu0
        %v1668 = vpop.trf.xlu0
        %v1669 = vpop.trf.xlu0
        %v1670 = vpop.trf.xlu0
        %v1671 = vpop.trf.xlu0
        %v1672 = vpop.trf.xlu0
        %v1673 = vpop.trf.xlu0
        %v1674 = vpop.trf.xlu0
        %v1675 = vpop.trf.xlu0
        %v1676 = vpop.trf.xlu0
        %v1677 = vpop.trf.xlu0
        %v1678 = vpop.trf.xlu0
        %v1679 = vpop.trf.xlu0
        %v1680 = vadd.f32 %v1632, %v318
        %v1681 = vadd.f32 %v1664, %v319
        %v1682 = vadd.f32 %v1633, %v320
        %v1683 = vadd.f32 %v1665, %v321
        %v1684 = vadd.f32 %v1634, %v322
        %v1685 = vadd.f32 %v1666, %v323
        %v1686 = vadd.f32 %v1635, %v324
        %v1687 = vadd.f32 %v1667, %v325
        %1688 = vst [vmem:[%s305] sm:$0xff] %v1680
        %1689 = vst [vmem:[%s305 + $0x8] sm:$0xff] %v1681
        %1690 = vst [vmem:[%s305 + $0x10] sm:$0xff] %v1682
        %1691 = vst [vmem:[%s305 + $0x18] sm:$0xff] %v1683
        %1692 = vst [vmem:[%s305 + $0x20] sm:$0xff] %v1684
        %1693 = vst [vmem:[%s305 + $0x28] sm:$0xff] %v1685
        %1694 = vst [vmem:[%s305 + $0x30] sm:$0xff] %v1686
        %1695 = vst [vmem:[%s305 + $0x38] sm:$0xff] %v1687
        %s1696 = sand.u32 %s164, 1
        %s1697 = scalar_lea.sflag [#allocation5], %s1696
        %s1698 = sand.u32 %s164, 1
        %s1699 = smul.addr %s1698, 64
        %s1700 = scalar_lea.vmem [#allocation9], %s1699
        // Predicated region
        $region57: #{tpu_custom_call.1} parent=43 // pred_check
          %p1701 = pneg %p174
        $region58: #{tpu_custom_call.1} parent=43 // pred_check_branch
          %1703 = sbr.rel (%p1701) target = $region60
        $region59: #{tpu_custom_call.1} parent=43 // pred_region
          %1705 = vsyncadd %s1697, 0
          %s1706 = smul.addr %s25, 8
          %s1707 = smul.addr %s1706, 8
          %s1708 = scalar_lea.hbm %s6, %s1707
          %s1709 = sshll.u32 %s1700, 4
          %s1710 = int_to_ptr.vmem [resolvable:$true] %s1709
          %s1711 = sshll.u32 %s1708, 4
          %s1712 = int_to_ptr.hbm [resolvable:$true] %s1711
          %1717 = dma.vmem_to_hbm [thread:$0]  %s1710, 1024, %s1712, %s1697, 256, 256, 16
        $region60: #{tpu_custom_call.1} parent=43 // pred_fallthru
          _
      $region44: #{tpu_custom_call.1} parent=5 // pred_fallthru
        _
      %p1718 = scmp.le.s32.totalorder 2, %s20
      // Predicated region
      $region61: #{tpu_custom_call.1} parent=5 // pred_check
        %p1719 = pneg %p1718
      $region62: #{tpu_custom_call.1} parent=5 // pred_check_branch
        %1721 = sbr.rel (%p1719) target = $region64
      $region63: #{tpu_custom_call.1} parent=5 // pred_region
        %s1722 = ssub.s32 %s20, 2
        // Predicated region
        $region65: #{tpu_custom_call.1} parent=63 // pred_check
          %p1723 = pneg %p180
        $region66: #{tpu_custom_call.1} parent=63 // pred_check_branch
          %1725 = sbr.rel (%p1723) target = $region68
        $region67: #{tpu_custom_call.1} parent=63 // pred_region
          %s1726 = sand.u32 %s165, 1
          %s1727 = scalar_lea.sflag [#allocation5], %s1726
          %s1728 = sand.u32 %s165, 1
          %s1729 = smul.addr %s1728, 64
          %s1730 = scalar_lea.vmem [#allocation9], %s1729
          %1732 = dma.done %s1727, 1024
        $region68: #{tpu_custom_call.1} parent=63 // pred_fallthru
          _
      $region64: #{tpu_custom_call.1} parent=5 // pred_fallthru
        _
    $region6: #{tpu_custom_call.1} parent=1 // loop_footer
      %s24 = sadd.s32 1, %s20
    $region7: #{tpu_custom_call.1} parent=1 // loop_footer_branch
      %19 = sbr.rel target = $region3
    $region8: #{tpu_custom_call.1} parent=1 // loop_exit
      _
    %1733 = vsyncpa [#allocation4], 1
    %s1734 = scalar_lea.sflag [#allocation4], 1
    %1735 = vsyncpa %s1734, 1
    %1736 = vsyncpa [#allocation7], 1
    %1737 = vsyncpa [#allocation5], 1
    %s1738 = scalar_lea.sflag [#allocation5], 1
    %1739 = vsyncpa %s1738, 1

</llo_original>
